<compile_context>
chip_gen: v6e
topology: v6e:2x2x1
jax: 0.10.0
libtpu: 0.0.40
codegen_flags: <defaults>
</compile_context>

<pallas_src>
import functools

import jax
import jax.numpy as jnp
import numpy as np
from jax.experimental import pallas as pl
from jax.experimental.pallas import tpu as pltpu


def _downsample_kernel(x_ref, csel_ref, o_ref, *, d, W, Wo, cast_to_f32, precision):
    # x_ref:    (1, 1, hd_blk, dd*W)   rows of the (b, c) plane, grouped by dd
    # csel_ref: (W, W)                 0/1 column-permutation matrix (shared, constant)
    # o_ref:    (1, dd, hd_blk, d*Wo)  the dd output-channel planes for (b, c)
    # d is a small static Python int -> loops fully unrolled at trace time.
    for hn in range(d):
        for hh in range(d):
            # Row slab for (hn, hh): xs[i, w] = x[b, c, i*dd + hn*d + hh, w]
            xs = x_ref[0, 0, :, pl.ds((hn * d + hh) * W, W)]          # (hd_blk, W)
            if cast_to_f32:
                xs = xs.astype(jnp.float32)
            # Column permutation on the MXU: K = W (not d*W).  0/1 weights -> exact.
            res = jnp.dot(xs, csel_ref[...],
                          preferred_element_type=jnp.float32,
                          precision=precision)                        # (hd_blk, W)
            res = res.astype(o_ref.dtype)
            for wn in range(d):
                o_ref[0, hn * d + wn, :, pl.ds(hh * Wo, Wo)] = (
                    res[:, wn * Wo:(wn + 1) * Wo])


def _ref_downsample(x, d):
    # Pure-layout JAX equivalent (used as exact fallback for non-float dtypes and as
    # the verification reference).
    B, C, H, W = x.shape
    dd = d * d
    hd, wd = H // dd, W // dd
    x6 = x.reshape(B, C, hd, d, d, wd, d, d)              # (b, c, i, hn, hh, j, wn, ww)
    y = jnp.transpose(x6, (0, 1, 3, 6, 2, 4, 5, 7))       # (b, c, hn, wn, i, hh, j, ww)
    return y.reshape(B, C * dd, hd * d, wd * d)


def downsample(x, dilation):
    B, C, H, W = x.shape
    d = int(dilation)
    dd = d * d
    assert H % dd == 0 and W % dd == 0, "H and W must be divisible by dilation**2"
    if d == 1:
        return x
    hd, Ho, Wo = H // dd, H // d, W // d
    dWo = d * Wo

    # dtype policy (the permutation must be exact):
    if x.dtype == jnp.bfloat16:
        csel_dtype = jnp.bfloat16
        precision, cast_to_f32 = jax.lax.Precision.DEFAULT, False
    elif x.dtype == jnp.float32:
        csel_dtype = jnp.float32
        precision, cast_to_f32 = jax.lax.Precision.HIGHEST, False
    elif x.dtype == jnp.float16:
        csel_dtype = jnp.float32
        precision, cast_to_f32 = jax.lax.Precision.HIGHEST, True
    else:
        # Integer / exotic dtypes: MXU round-trip through f32 is not exact; use the
        # pure-layout path instead.
        return _ref_downsample(x, d)

    # 0/1 column-permutation matrix: Csel[w, wn*Wo + ow] = 1 iff
    #   w == (ow // d) * dd + wn * d + (ow % d).
    ow = np.arange(Wo)
    csel_np = np.zeros((W, W), np.float32)
    for wn in range(d):
        iw = (ow // d) * dd + wn * d + (ow % d)
        csel_np[iw, wn * Wo + ow] = 1.0
    csel = jnp.asarray(csel_np, dtype=csel_dtype)

    # Free, metadata-only reshapes: rows grouped by dd on input; lane-dense output.
    x_r = x.reshape(B, C, hd, dd * W)
    out_shape = jax.ShapeDtypeStruct((B, C * dd, hd, dWo), x.dtype)

    # ---- per-generation VMEM budget & hd tiling --------------------------------------
    try:
        vmem_cap = int(pltpu.get_tpu_info().vmem_capacity_bytes)
        if vmem_cap <= 0:
            raise ValueError("bad vmem capacity")
    except Exception:
        vmem_cap = 64 * 1024 * 1024          # assume the smallest (v7x) if unknown
    budget = (vmem_cap * 3) // 4             # leave headroom for Mosaic internals

    itemsize = x.dtype.itemsize
    csel_bytes = 2 * W * W * csel.dtype.itemsize          # double-buffered (constant map)
    # per hd-row: in block + out block (same size), double-buffered, + f32 temporaries.
    per_row = 2 * 2 * (dd * W * itemsize) + 2 * (W * 4)
    fixed = csel_bytes + (2 << 20)
    max_rows = int(max((budget - fixed) // per_row, 8))

    if hd <= max_rows:
        hd_blk = hd
    else:
        hd_blk = max((max_rows // 8) * 8, 8)               # (8,128) rule: multiple of 8
        for cand in range(hd_blk, 7, -8):                  # prefer an even divisor of hd
            if hd % cand == 0:
                hd_blk = cand
                break
    n_hblk = int(pl.cdiv(hd, hd_blk))

    needed = fixed + per_row * hd_blk
    vmem_limit = int(min(max(needed, 32 * 1024 * 1024), vmem_cap - 4 * 1024 * 1024))

    kernel = functools.partial(_downsample_kernel, d=d, W=W, Wo=Wo,
                               cast_to_f32=cast_to_f32, precision=precision)

    y = pl.pallas_call(
        kernel,
        out_shape=out_shape,
        grid_spec=pltpu.PrefetchScalarGridSpec(
            num_scalar_prefetch=0,
            grid=(B, C, n_hblk),
            in_specs=[
                pl.BlockSpec((1, 1, hd_blk, dd * W), lambda b, c, h: (b, c, h, 0)),
                pl.BlockSpec((W, W), lambda b, c, h: (0, 0)),
            ],
            out_specs=pl.BlockSpec((1, dd, hd_blk, dWo), lambda b, c, h: (b, c, h, 0)),
        ),
        compiler_params=pltpu.CompilerParams(
            dimension_semantics=("parallel", "parallel", "parallel"),
            vmem_limit_bytes=vmem_limit),
    )(x_r, csel)

    return y.reshape(B, C * dd, Ho, Wo)


if __name__ == "__main__":
    key = jax.random.PRNGKey(0)
    B, C, H, W = 2, 4, 16, 16
    dilation = 2
    x = jax.random.normal(key, (B, C, H, W), dtype=jnp.float32)

    # f32 path (single HIGHEST-precision (W,W) selection matmul -> bit-exact permutation).
    y = jax.block_until_ready(downsample(x, dilation))
    y_ref = _ref_downsample(x, dilation)
    assert y.shape == (B, C * dilation ** 2, H // dilation, W // dilation)
    np.testing.assert_allclose(np.asarray(y), np.asarray(y_ref), rtol=1e-6, atol=1e-6)

    # bf16 path (single-pass bf16 MXU, no up-cast; 0/1 selection exact in bf16).
    xb = x.astype(jnp.bfloat16)
    yb = jax.block_until_ready(downsample(xb, dilation))
    yb_ref = _ref_downsample(xb, dilation)
    np.testing.assert_allclose(np.asarray(yb, dtype=np.float32),
                               np.asarray(yb_ref, dtype=np.float32),
                               rtol=1e-2, atol=1e-2)

    print("KERNEL_OK")
</pallas_src>

<mosaic_0001>
module attributes {stable_mosaic.version = 11 : i64} {
  func.func @_downsample_kernel(%arg0: i32, %arg1: i32, %arg2: i32, %arg3: memref<1x1x4x64xf32, #tpu.memory_space<vmem>>, %arg4: memref<16x16xf32, #tpu.memory_space<vmem>>, %arg5: memref<1x4x4x16xf32, #tpu.memory_space<vmem>>) attributes {dimension_semantics = [#tpu.dimension_semantics<parallel>, #tpu.dimension_semantics<parallel>, #tpu.dimension_semantics<parallel>], iteration_bounds = array<i64: 2, 4, 1>, scalar_prefetch = 0 : i64, scratch_operands = 0 : i64, tpu.core_type = #tpu.core_type<tc>, window_params = [{transform_indices = @transform_0, window_bounds = array<i64: 1, 1, 4, 64>}, {pipeline_mode = #tpu.pipeline_mode<synchronous>, transform_indices = @transform_1, window_bounds = array<i64: 16, 16>}, {transform_indices = @transform_2, window_bounds = array<i64: 1, 4, 4, 16>}]} {
    %c0 = arith.constant 0 : index
    %c0_0 = arith.constant 0 : index
    %c0_1 = arith.constant 0 : index
    %c0_2 = arith.constant 0 : index
    %0 = vector.load %arg3[%c0, %c0_0, %c0_1, %c0_2] : memref<1x1x4x64xf32, #tpu.memory_space<vmem>>, vector<1x1x4x16xf32>
    %1 = vector.shape_cast %0 : vector<1x1x4x16xf32> to vector<4x16xf32>
    %c0_3 = arith.constant 0 : index
    %c0_4 = arith.constant 0 : index
    %2 = vector.load %arg4[%c0_3, %c0_4] : memref<16x16xf32, #tpu.memory_space<vmem>>, vector<16x16xf32>
    %cst = arith.constant dense<0.000000e+00> : vector<4x16xf32>
    %3 = tpu.matmul %1, %2, %cst {dimension_numbers = #tpu.dot_dimension_numbers<[1], [0], [0], [1], [0, 0, 1, 1], [], []>, precision = #tpu.contract_precision<fp32>} : vector<4x16xf32>, vector<16x16xf32>, vector<4x16xf32> -> vector<4x16xf32>
    %4 = vector.extract_strided_slice %3 {offsets = [0, 0], sizes = [4, 8], strides = [1, 1]} : vector<4x16xf32> to vector<4x8xf32>
    %c0_5 = arith.constant 0 : index
    %c0_6 = arith.constant 0 : index
    %c0_7 = arith.constant 0 : index
    %c0_8 = arith.constant 0 : index
    %5 = vector.load %arg5[%c0_5, %c0_6, %c0_7, %c0_8] : memref<1x4x4x16xf32, #tpu.memory_space<vmem>>, vector<1x1x4x8xf32>
    %6 = vector.shape_cast %5 : vector<1x1x4x8xf32> to vector<4x8xf32>
    %7 = vector.shape_cast %4 : vector<4x8xf32> to vector<1x1x4x8xf32>
    tpu.vector_store %arg5[%c0_5, %c0_6, %c0_7, %c0_8], %7 {strides = array<i32>} : memref<1x4x4x16xf32, #tpu.memory_space<vmem>>, vector<1x1x4x8xf32>,
    %8 = vector.extract_strided_slice %3 {offsets = [0, 8], sizes = [4, 8], strides = [1, 1]} : vector<4x16xf32> to vector<4x8xf32>
    %c0_9 = arith.constant 0 : index
    %c1 = arith.constant 1 : index
    %c0_10 = arith.constant 0 : index
    %c0_11 = arith.constant 0 : index
    %9 = vector.load %arg5[%c0_9, %c1, %c0_10, %c0_11] : memref<1x4x4x16xf32, #tpu.memory_space<vmem>>, vector<1x1x4x8xf32>
    %10 = vector.shape_cast %9 : vector<1x1x4x8xf32> to vector<4x8xf32>
    %11 = vector.shape_cast %8 : vector<4x8xf32> to vector<1x1x4x8xf32>
    tpu.vector_store %arg5[%c0_9, %c1, %c0_10, %c0_11], %11 {strides = array<i32>} : memref<1x4x4x16xf32, #tpu.memory_space<vmem>>, vector<1x1x4x8xf32>,
    %c0_12 = arith.constant 0 : index
    %c0_13 = arith.constant 0 : index
    %c0_14 = arith.constant 0 : index
    %c16 = arith.constant 16 : index
    %12 = vector.load %arg3[%c0_12, %c0_13, %c0_14, %c16] : memref<1x1x4x64xf32, #tpu.memory_space<vmem>>, vector<1x1x4x16xf32>
    %13 = vector.shape_cast %12 : vector<1x1x4x16xf32> to vector<4x16xf32>
    %c0_15 = arith.constant 0 : index
    %c0_16 = arith.constant 0 : index
    %14 = vector.load %arg4[%c0_15, %c0_16] : memref<16x16xf32, #tpu.memory_space<vmem>>, vector<16x16xf32>
    %cst_17 = arith.constant dense<0.000000e+00> : vector<4x16xf32>
    %15 = tpu.matmul %13, %14, %cst_17 {dimension_numbers = #tpu.dot_dimension_numbers<[1], [0], [0], [1], [0, 0, 1, 1], [], []>, precision = #tpu.contract_precision<fp32>} : vector<4x16xf32>, vector<16x16xf32>, vector<4x16xf32> -> vector<4x16xf32>
    %16 = vector.extract_strided_slice %15 {offsets = [0, 0], sizes = [4, 8], strides = [1, 1]} : vector<4x16xf32> to vector<4x8xf32>
    %c0_18 = arith.constant 0 : index
    %c0_19 = arith.constant 0 : index
    %c0_20 = arith.constant 0 : index
    %c8 = arith.constant 8 : index
    %17 = vector.load %arg5[%c0_18, %c0_19, %c0_20, %c8] : memref<1x4x4x16xf32, #tpu.memory_space<vmem>>, vector<1x1x4x8xf32>
    %18 = vector.shape_cast %17 : vector<1x1x4x8xf32> to vector<4x8xf32>
    %19 = vector.shape_cast %16 : vector<4x8xf32> to vector<1x1x4x8xf32>
    tpu.vector_store %arg5[%c0_18, %c0_19, %c0_20, %c8], %19 {strides = array<i32>} : memref<1x4x4x16xf32, #tpu.memory_space<vmem>>, vector<1x1x4x8xf32>,
    %20 = vector.extract_strided_slice %15 {offsets = [0, 8], sizes = [4, 8], strides = [1, 1]} : vector<4x16xf32> to vector<4x8xf32>
    %c0_21 = arith.constant 0 : index
    %c1_22 = arith.constant 1 : index
    %c0_23 = arith.constant 0 : index
    %c8_24 = arith.constant 8 : index
    %21 = vector.load %arg5[%c0_21, %c1_22, %c0_23, %c8_24] : memref<1x4x4x16xf32, #tpu.memory_space<vmem>>, vector<1x1x4x8xf32>
    %22 = vector.shape_cast %21 : vector<1x1x4x8xf32> to vector<4x8xf32>
    %23 = vector.shape_cast %20 : vector<4x8xf32> to vector<1x1x4x8xf32>
    tpu.vector_store %arg5[%c0_21, %c1_22, %c0_23, %c8_24], %23 {strides = array<i32>} : memref<1x4x4x16xf32, #tpu.memory_space<vmem>>, vector<1x1x4x8xf32>,
    %c0_25 = arith.constant 0 : index
    %c0_26 = arith.constant 0 : index
    %c0_27 = arith.constant 0 : index
    %c32 = arith.constant 32 : index
    %24 = vector.load %arg3[%c0_25, %c0_26, %c0_27, %c32] : memref<1x1x4x64xf32, #tpu.memory_space<vmem>>, vector<1x1x4x16xf32>
    %25 = vector.shape_cast %24 : vector<1x1x4x16xf32> to vector<4x16xf32>
    %c0_28 = arith.constant 0 : index
    %c0_29 = arith.constant 0 : index
    %26 = vector.load %arg4[%c0_28, %c0_29] : memref<16x16xf32, #tpu.memory_space<vmem>>, vector<16x16xf32>
    %cst_30 = arith.constant dense<0.000000e+00> : vector<4x16xf32>
    %27 = tpu.matmul %25, %26, %cst_30 {dimension_numbers = #tpu.dot_dimension_numbers<[1], [0], [0], [1], [0, 0, 1, 1], [], []>, precision = #tpu.contract_precision<fp32>} : vector<4x16xf32>, vector<16x16xf32>, vector<4x16xf32> -> vector<4x16xf32>
    %28 = vector.extract_strided_slice %27 {offsets = [0, 0], sizes = [4, 8], strides = [1, 1]} : vector<4x16xf32> to vector<4x8xf32>
    %c0_31 = arith.constant 0 : index
    %c2 = arith.constant 2 : index
    %c0_32 = arith.constant 0 : index
    %c0_33 = arith.constant 0 : index
    %29 = vector.load %arg5[%c0_31, %c2, %c0_32, %c0_33] : memref<1x4x4x16xf32, #tpu.memory_space<vmem>>, vector<1x1x4x8xf32>
    %30 = vector.shape_cast %29 : vector<1x1x4x8xf32> to vector<4x8xf32>
    %31 = vector.shape_cast %28 : vector<4x8xf32> to vector<1x1x4x8xf32>
    tpu.vector_store %arg5[%c0_31, %c2, %c0_32, %c0_33], %31 {strides = array<i32>} : memref<1x4x4x16xf32, #tpu.memory_space<vmem>>, vector<1x1x4x8xf32>,
    %32 = vector.extract_strided_slice %27 {offsets = [0, 8], sizes = [4, 8], strides = [1, 1]} : vector<4x16xf32> to vector<4x8xf32>
    %c0_34 = arith.constant 0 : index
    %c3 = arith.constant 3 : index
    %c0_35 = arith.constant 0 : index
    %c0_36 = arith.constant 0 : index
    %33 = vector.load %arg5[%c0_34, %c3, %c0_35, %c0_36] : memref<1x4x4x16xf32, #tpu.memory_space<vmem>>, vector<1x1x4x8xf32>
    %34 = vector.shape_cast %33 : vector<1x1x4x8xf32> to vector<4x8xf32>
    %35 = vector.shape_cast %32 : vector<4x8xf32> to vector<1x1x4x8xf32>
    tpu.vector_store %arg5[%c0_34, %c3, %c0_35, %c0_36], %35 {strides = array<i32>} : memref<1x4x4x16xf32, #tpu.memory_space<vmem>>, vector<1x1x4x8xf32>,
    %c0_37 = arith.constant 0 : index
    %c0_38 = arith.constant 0 : index
    %c0_39 = arith.constant 0 : index
    %c48 = arith.constant 48 : index
    %36 = vector.load %arg3[%c0_37, %c0_38, %c0_39, %c48] : memref<1x1x4x64xf32, #tpu.memory_space<vmem>>, vector<1x1x4x16xf32>
    %37 = vector.shape_cast %36 : vector<1x1x4x16xf32> to vector<4x16xf32>
    %c0_40 = arith.constant 0 : index
    %c0_41 = arith.constant 0 : index
    %38 = vector.load %arg4[%c0_40, %c0_41] : memref<16x16xf32, #tpu.memory_space<vmem>>, vector<16x16xf32>
    %cst_42 = arith.constant dense<0.000000e+00> : vector<4x16xf32>
    %39 = tpu.matmul %37, %38, %cst_42 {dimension_numbers = #tpu.dot_dimension_numbers<[1], [0], [0], [1], [0, 0, 1, 1], [], []>, precision = #tpu.contract_precision<fp32>} : vector<4x16xf32>, vector<16x16xf32>, vector<4x16xf32> -> vector<4x16xf32>
    %40 = vector.extract_strided_slice %39 {offsets = [0, 0], sizes = [4, 8], strides = [1, 1]} : vector<4x16xf32> to vector<4x8xf32>
    %c0_43 = arith.constant 0 : index
    %c2_44 = arith.constant 2 : index
    %c0_45 = arith.constant 0 : index
    %c8_46 = arith.constant 8 : index
    %41 = vector.load %arg5[%c0_43, %c2_44, %c0_45, %c8_46] : memref<1x4x4x16xf32, #tpu.memory_space<vmem>>, vector<1x1x4x8xf32>
    %42 = vector.shape_cast %41 : vector<1x1x4x8xf32> to vector<4x8xf32>
    %43 = vector.shape_cast %40 : vector<4x8xf32> to vector<1x1x4x8xf32>
    tpu.vector_store %arg5[%c0_43, %c2_44, %c0_45, %c8_46], %43 {strides = array<i32>} : memref<1x4x4x16xf32, #tpu.memory_space<vmem>>, vector<1x1x4x8xf32>,
    %44 = vector.extract_strided_slice %39 {offsets = [0, 8], sizes = [4, 8], strides = [1, 1]} : vector<4x16xf32> to vector<4x8xf32>
    %c0_47 = arith.constant 0 : index
    %c3_48 = arith.constant 3 : index
    %c0_49 = arith.constant 0 : index
    %c8_50 = arith.constant 8 : index
    %45 = vector.load %arg5[%c0_47, %c3_48, %c0_49, %c8_50] : memref<1x4x4x16xf32, #tpu.memory_space<vmem>>, vector<1x1x4x8xf32>
    %46 = vector.shape_cast %45 : vector<1x1x4x8xf32> to vector<4x8xf32>
    %47 = vector.shape_cast %44 : vector<4x8xf32> to vector<1x1x4x8xf32>
    tpu.vector_store %arg5[%c0_47, %c3_48, %c0_49, %c8_50], %47 {strides = array<i32>} : memref<1x4x4x16xf32, #tpu.memory_space<vmem>>, vector<1x1x4x8xf32>,
    return
  }
  func.func @transform_0(%arg0: i32, %arg1: i32, %arg2: i32) -> (i32, i32, i32, i32) {
    %c0_i32 = arith.constant 0 : i32
    %c0_i32_0 = arith.constant 0 : i32
    return %arg0, %arg1, %arg2, %c0_i32 : i32, i32, i32, i32
  }
  func.func @transform_1(%arg0: i32, %arg1: i32, %arg2: i32) -> (i32, i32) {
    %c0_i32 = arith.constant 0 : i32
    %c0_i32_0 = arith.constant 0 : i32
    %c0_i32_1 = arith.constant 0 : i32
    return %c0_i32, %c0_i32_0 : i32, i32
  }
  func.func @transform_2(%arg0: i32, %arg1: i32, %arg2: i32) -> (i32, i32, i32, i32) {
    %c0_i32 = arith.constant 0 : i32
    %c0_i32_0 = arith.constant 0 : i32
    return %arg0, %arg1, %arg2, %c0_i32 : i32, i32, i32, i32
  }
}

</mosaic_0001>

<llo_original>
// kernel: tpu_custom_call.1
$region0: #{tpu_custom_call.1}
  #allocation0 [shape = 'u32[]', space=smem, size = 0x4, offset = 0x4, fixed_abs, tag = 'smem constant byte address 0x4 - core index']
  #allocation1 [shape = 'u32[144,128]{1,0:T(1,128)}', space=vmem, size = 0x12000, scoped, tag = 'internal scratch']
  %s0 = inlined_call_operand.hbm [shape: f32[2,4,4,64], index: 0, kind: input, shape index: {}]
  %s1 = inlined_call_operand.hbm [shape: f32[16,16], index: 1, kind: input, shape index: {}]
  %s2 = inlined_call_operand.hbm [shape: f32[2,16,4,16], index: 2, kind: output, shape index: {}]
  %s3 = sld [smem:[#allocation0]]
  $region49: #{tpu_custom_call.1} parent=0
    _
  %s5 = ssub.s32 1, %s3
  %s6 = scalar_select 0, %s5, %s3
  $region1: #{tpu_custom_call.1} parent=0
    #allocation2 [shape = 'u8[4096]{0}', space=vmem, size = 0x1000, scoped, tag = 'input window, operand 0']
    #allocation3 [shape = 's32[2]{0}', space=sflag, size = 0x8, scoped, tag = 'scoped memory for tpu_custom_call.1']
    #allocation4 [shape = 's32[2]{0}', space=sflag, size = 0x8, scoped, tag = 'scoped memory for tpu_custom_call.1']
    #allocation5 [shape = 'u8[8192]{0}', space=vmem, size = 0x2000, scoped, tag = 'input window, operand 1, single buffered']
    #allocation6 [shape = 's32[1]{0}', space=sflag, size = 0x4, scoped, tag = 'scoped memory for tpu_custom_call.1']
    #allocation7 [shape = 'u8[16384]{0}', space=vmem, size = 0x4000, scoped, tag = 'output window, operand 0']
    %7 = vsyncpa [#allocation3], 0
    %s8 = scalar_lea.sflag [#allocation3], 1
    %9 = vsyncpa %s8, 0
    %10 = vsyncpa [#allocation6], 0
    %11 = vsyncpa [#allocation4], 0
    %s12 = scalar_lea.sflag [#allocation4], 1
    %13 = vsyncpa %s12, 0
    loop: start=0, step=1, limit=10
    $region2: #{tpu_custom_call.1} parent=1 // loop_pre_header
      _
    $region3: #{tpu_custom_call.1} parent=1 // loop_header
      %s15 = sphi 0, %s19
      %p16 = scmp.ge.s32.totalorder %s15, 10
      %s22 = sphi 0, %s41
      %s23 = sphi 0, %s37
      %s24 = sphi 0, %s33
      %s25 = sphi 0, %s22
      %s26 = sphi 0, %s23
      %s27 = sphi 0, %s24
      %s28 = sphi 0, %s25
      %s29 = sphi 0, %s26
      %s30 = sphi 0, %s27
      %s48 = sphi 0, %s50
      %s51 = sphi 0, %s48
      %s52 = sphi 0, %s51
      %s68 = sphi 0, %s52
      %s72 = sphi 0, %s72
      %s74 = sphi 0, %s72
      %s75 = sphi 0, %s74
      %s89 = sphi 0, %s75
      %s99 = sphi 0, %s101
      %s102 = sphi 0, %s99
      %s103 = sphi 0, %s102
      %s119 = sphi 0, %s103
    $region4: #{tpu_custom_call.1} parent=1 // loop_header_branch
      %18 = sbr.rel (%p16) target = $region8
    $region5: #{tpu_custom_call.1} parent=1 // loop_body
      %s20 = ssub.s32 %s15, 1
      %s21 = ssub.s32 %s15, 2
      %s31 = sadd.s32 1, %s24
      %p32 = scmp.ge.s32.totalorder %s31, 1
      %s33 = scalar_select %p32, 0, %s31
      %s34 = sadd.s32 1, %s23
      %s35 = scalar_select %p32, %s34, %s23
      %p36 = scmp.ge.s32.totalorder %s35, 4
      %s37 = scalar_select %p36, 0, %s35
      %s38 = sadd.s32 1, %s22
      %s39 = scalar_select %p36, %s38, %s22
      %p40 = scmp.ge.s32.totalorder %s39, 2
      %s41 = scalar_select %p40, 0, %s39
      %s42 = ssub.s32 %s22, %s41
      %s43 = ssub.s32 %s23, %s37
      %s44 = sor.u32 %s42, %s43
      %s45 = ssub.s32 %s24, %s33
      %s46 = sor.u32 %s44, %s45
      %p47 = scmp.eq.s32.totalorder %s46, 0
      %s49 = sadd.s32 %s48, 1
      %s50 = scalar_select %p47, %s48, %s49
      %p53 = pneg %p47
      %p54 = scmp.eq.s32.totalorder %s15, 7
      %p55 = por %p53, %p54
      %p56 = scmp.ne.s32.totalorder %s48, %s51
      %p57 = scmp.eq.s32.totalorder %s15, 0
      %p58 = por %p56, %p57
      %p59 = scmp.ne.s32.totalorder %s48, %s51
      %p60 = scmp.eq.s32.totalorder %s20, 7
      %p61 = por %p59, %p60
      %p62 = scmp.ne.s32.totalorder %s51, %s52
      %p63 = scmp.eq.s32.totalorder %s20, 0
      %p64 = por %p62, %p63
      %p65 = scmp.ne.s32.totalorder %s51, %s52
      %p66 = scmp.eq.s32.totalorder %s21, 7
      %p67 = por %p65, %p66
      %p69 = scmp.ne.s32.totalorder %s52, %s68
      %p70 = scmp.eq.s32.totalorder %s21, 0
      %p71 = por %p69, %p70
      %s73 = sadd.s32 %s72, 1
      %p76 = scmp.eq.s32.totalorder %s15, 7
      %p77 = scmp.ne.s32.totalorder %s72, %s74
      %p78 = scmp.eq.s32.totalorder %s15, 0
      %p79 = por %p77, %p78
      %p80 = scmp.ne.s32.totalorder %s72, %s74
      %p81 = scmp.eq.s32.totalorder %s20, 7
      %p82 = por %p80, %p81
      %p83 = scmp.ne.s32.totalorder %s74, %s75
      %p84 = scmp.eq.s32.totalorder %s20, 0
      %p85 = por %p83, %p84
      %p86 = scmp.ne.s32.totalorder %s74, %s75
      %p87 = scmp.eq.s32.totalorder %s21, 7
      %p88 = por %p86, %p87
      %p90 = scmp.ne.s32.totalorder %s75, %s89
      %p91 = scmp.eq.s32.totalorder %s21, 0
      %p92 = por %p90, %p91
      %s93 = ssub.s32 %s22, %s41
      %s94 = ssub.s32 %s23, %s37
      %s95 = sor.u32 %s93, %s94
      %s96 = ssub.s32 %s24, %s33
      %s97 = sor.u32 %s95, %s96
      %p98 = scmp.eq.s32.totalorder %s97, 0
      %s100 = sadd.s32 %s99, 1
      %s101 = scalar_select %p98, %s99, %s100
      %p104 = pneg %p98
      %p105 = scmp.eq.s32.totalorder %s15, 7
      %p106 = por %p104, %p105
      %p107 = scmp.ne.s32.totalorder %s99, %s102
      %p108 = scmp.eq.s32.totalorder %s15, 0
      %p109 = por %p107, %p108
      %p110 = scmp.ne.s32.totalorder %s99, %s102
      %p111 = scmp.eq.s32.totalorder %s20, 7
      %p112 = por %p110, %p111
      %p113 = scmp.ne.s32.totalorder %s102, %s103
      %p114 = scmp.eq.s32.totalorder %s20, 0
      %p115 = por %p113, %p114
      %p116 = scmp.ne.s32.totalorder %s102, %s103
      %p117 = scmp.eq.s32.totalorder %s21, 7
      %p118 = por %p116, %p117
      %p120 = scmp.ne.s32.totalorder %s103, %s119
      %p121 = scmp.eq.s32.totalorder %s21, 0
      %p122 = por %p120, %p121
      %p123 = scmp.le.s32.totalorder 1, %s15
      %p124 = scmp.lt.s32.totalorder %s15, 9
      %p125 = pnand %p123, %p124
      %p126 = pneg %p125
      // Predicated region
      $region9: #{tpu_custom_call.1} parent=5 // pred_check
        _
      $region10: #{tpu_custom_call.1} parent=5 // pred_check_branch
        %128 = sbr.rel (%p125) target = $region12
      $region11: #{tpu_custom_call.1} parent=5 // pred_region
        %s129 = ssub.s32 %s15, 1
        // Predicated region
        $region13: #{tpu_custom_call.1} parent=11 // pred_check
          %p130 = pneg %p85
        $region14: #{tpu_custom_call.1} parent=11 // pred_check_branch
          %132 = sbr.rel (%p130) target = $region16
        $region15: #{tpu_custom_call.1} parent=11 // pred_region
          %s134 = ssub.s32 256, 256
          %135 = vsyncadd [#allocation6], %s134
          %s136 = sshll.u32 [#allocation5], 4
          %s137 = int_to_ptr.vmem [resolvable:$true] %s136
          %142 = dma.hbm_to_vmem [thread:$0]  %s1, 256, %s137, [#allocation6], 128, 128, 8
        $region16: #{tpu_custom_call.1} parent=11 // pred_fallthru
          _
      $region12: #{tpu_custom_call.1} parent=5 // pred_fallthru
        _
      %p143 = scmp.lt.s32.totalorder %s15, 8
      // Predicated region
      $region17: #{tpu_custom_call.1} parent=5 // pred_check
        %p144 = pneg %p143
      $region18: #{tpu_custom_call.1} parent=5 // pred_check_branch
        %146 = sbr.rel (%p144) target = $region20
      $region19: #{tpu_custom_call.1} parent=5 // pred_region
        // Predicated region
        $region21: #{tpu_custom_call.1} parent=19 // pred_check
          %p147 = pneg %p58
        $region22: #{tpu_custom_call.1} parent=19 // pred_check_branch
          %149 = sbr.rel (%p147) target = $region24
        $region23: #{tpu_custom_call.1} parent=19 // pred_region
          %s150 = sand.u32 %s48, 1
          %s151 = scalar_lea.sflag [#allocation3], %s150
          %s152 = sand.u32 %s48, 1
          %s153 = smul.addr %s152, 4
          %s154 = scalar_lea.vmem [#allocation2], %s153
          %s156 = ssub.s32 64, 64
          %157 = vsyncadd %s151, %s156
          %s158 = sadd.s32 %s24, %s23
          %s159 = smul.addr %s22, 4
          %s160 = sadd.s32 %s158, %s159
          %s161 = smul.addr %s160, 64
          %s162 = scalar_lea.hbm %s0, %s161
          %s164 = sshll.u32 %s154, 4
          %s165 = int_to_ptr.vmem [resolvable:$true] %s164
          %167 = dma.hbm_to_vmem [thread:$0]  %s162, 64, %s165, %s151
        $region24: #{tpu_custom_call.1} parent=19 // pred_fallthru
          _
      $region20: #{tpu_custom_call.1} parent=5 // pred_fallthru
        _
      %p168 = scmp.le.s32.totalorder 1, %s15
      %p169 = scmp.lt.s32.totalorder %s15, 9
      %p170 = pnand %p168, %p169
      %p171 = pneg %p170
      // Predicated region
      $region25: #{tpu_custom_call.1} parent=5 // pred_check
        _
      $region26: #{tpu_custom_call.1} parent=5 // pred_check_branch
        %173 = sbr.rel (%p170) target = $region28
      $region27: #{tpu_custom_call.1} parent=5 // pred_region
        %s174 = ssub.s32 %s15, 1
        %s175 = sand.u32 %s51, 1
        %s176 = scalar_lea.sflag [#allocation3], %s175
        %s177 = sand.u32 %s51, 1
        %s178 = smul.addr %s177, 4
        %s179 = scalar_lea.vmem [#allocation2], %s178
        // Predicated region
        $region29: #{tpu_custom_call.1} parent=27 // pred_check
          %p180 = pneg %p64
        $region30: #{tpu_custom_call.1} parent=27 // pred_check_branch
          %182 = sbr.rel (%p180) target = $region32
        $region31: #{tpu_custom_call.1} parent=27 // pred_region
          %183 = dma.done %s176, 64
        $region32: #{tpu_custom_call.1} parent=27 // pred_fallthru
          _
        // Predicated region
        $region33: #{tpu_custom_call.1} parent=27 // pred_check
          %p184 = pneg %p85
        $region34: #{tpu_custom_call.1} parent=27 // pred_check_branch
          %186 = sbr.rel (%p184) target = $region36
        $region35: #{tpu_custom_call.1} parent=27 // pred_region
          %187 = dma.done [#allocation6], 256
        $region36: #{tpu_custom_call.1} parent=27 // pred_fallthru
          _
        %s188 = sand.u32 %s51, 1
        %s189 = scalar_lea.sflag [#allocation3], %s188
        %s190 = sand.u32 %s51, 1
        %s191 = smul.addr %s190, 4
        %s192 = scalar_lea.vmem [#allocation2], %s191
        %p193 = pneg %p64
        %p194 = pneg %p61
        %p195 = pneg %p85
        %p196 = pneg %p82
        %p197 = pneg %p115
        %p198 = pneg %p112
        %s199 = sand.u32 %s102, 1
        %s200 = scalar_lea.sflag [#allocation4], %s199
        %s201 = sand.u32 %s102, 1
        %s202 = smul.addr %s201, 16
        %s203 = scalar_lea.vmem [#allocation7], %s202
        %s204 = smul.u32 4, %s26
        %v205 = vld [vmem:[%s179] sm:$0xf]
        %v206 = vld [vmem:[#allocation5] sm:$0xff]
        %v207 = vld [vmem:[#allocation5 + $0x8] sm:$0xff]
        %vm208 = vcmask 130048
        %v210 = vsel %vm208, %v205, 0
        %212 = vmatprep.subr.mxu0 0.0
        %213 = vmatpush1.msra.mxu0 0.0
        %214 = vmatprep.subr.mxu0 0.0
        %215 = vmatpush1.msra.mxu0 0.0
        %216 = vmatprep.subr.mxu0 0.0
        %217 = vmatpush1.msra.mxu0 0.0
        %218 = vmatprep.subr.mxu0 0.0
        %219 = vmatpush1.msra.mxu0 0.0
        %220 = vmatprep.subr.mxu0 0.0
        %221 = vmatpush1.msra.mxu0 0.0
        %222 = vmatprep.subr.mxu0 0.0
        %223 = vmatpush1.msra.mxu0 0.0
        %224 = vmatprep.subr.mxu0 0.0
        %225 = vmatpush1.msra.mxu0 0.0
        %226 = vmatprep.subr.mxu0 0.0
        %227 = vmatpush1.msra.mxu0 0.0
        %228 = vmatprep.subr.mxu0 0.0
        %229 = vmatpush1.msra.mxu0 0.0
        %230 = vmatprep.subr.mxu0 0.0
        %231 = vmatpush1.msra.mxu0 0.0
        %232 = vmatprep.subr.mxu0 0.0
        %233 = vmatpush1.msra.mxu0 0.0
        %234 = vmatprep.subr.mxu0 0.0
        %235 = vmatpush1.msra.mxu0 0.0
        %236 = vmatprep.subr.mxu0 0.0
        %237 = vmatpush1.msra.mxu0 0.0
        %238 = vmatprep.subr.mxu0 0.0
        %239 = vmatpush1.msra.mxu0 0.0
        %240 = vmatprep.subr.mxu0 0.0
        %v241 = vand.u32 %v207, 4294901760
        %242 = vmatpush1.msra.mxu0 %v241
        %243 = vmatprep.subr.mxu0 0.0
        %v244 = vand.u32 %v206, 4294901760
        %245 = vmatpush1.msra.mxu0 %v244
        %246 = vmatprep.subr.mxu0 0.0
        %247 = vmatpush2.msra.mxu0 0.0
        %248 = vmatprep.subr.mxu0 0.0
        %249 = vmatpush2.msra.mxu0 0.0
        %250 = vmatprep.subr.mxu0 0.0
        %251 = vmatpush2.msra.mxu0 0.0
        %252 = vmatprep.subr.mxu0 0.0
        %253 = vmatpush2.msra.mxu0 0.0
        %254 = vmatprep.subr.mxu0 0.0
        %255 = vmatpush2.msra.mxu0 0.0
        %256 = vmatprep.subr.mxu0 0.0
        %257 = vmatpush2.msra.mxu0 0.0
        %258 = vmatprep.subr.mxu0 0.0
        %259 = vmatpush2.msra.mxu0 0.0
        %260 = vmatprep.subr.mxu0 0.0
        %261 = vmatpush2.msra.mxu0 0.0
        %262 = vmatprep.subr.mxu0 0.0
        %263 = vmatpush2.msra.mxu0 0.0
        %264 = vmatprep.subr.mxu0 0.0
        %265 = vmatpush2.msra.mxu0 0.0
        %266 = vmatprep.subr.mxu0 0.0
        %267 = vmatpush2.msra.mxu0 0.0
        %268 = vmatprep.subr.mxu0 0.0
        %269 = vmatpush2.msra.mxu0 0.0
        %270 = vmatprep.subr.mxu0 0.0
        %271 = vmatpush2.msra.mxu0 0.0
        %272 = vmatprep.subr.mxu0 0.0
        %273 = vmatpush2.msra.mxu0 0.0
        %274 = vmatprep.subr.mxu0 0.0
        %275 = vmatpush2.msra.mxu0 0.0
        %276 = vmatprep.subr.mxu0 0.0
        %277 = vmatpush2.msra.mxu0 0.0
        %278 = vmatprep.mubr.f32.mxu0 0.0
        %v279 = vand.u32 %v210, 4294901760
        %v280 = vsub.f32 %v210, %v279
        %v281 = vand.u32 %v280, 4294901760
        %v282 = vsub.f32 %v280, %v281
        %v283 = vand.u32 %v282, 4294901760
        %284 = vmatmul.mubr.f32.gmra.mxu0 %v283
        %v285 = vpop.f32.mrf.mxu0
        %v286 = vadd.f32 0.0, %v285
        %v287 = vpop.f32.mrf.mxu0
        %288 = vdwg.mxu0
        %289 = vmatprep.subr.mxu0 0.0
        %290 = vmatpush1.msra.mxu0 0.0
        %291 = vmatprep.subr.mxu0 0.0
        %292 = vmatpush1.msra.mxu0 0.0
        %293 = vmatprep.subr.mxu0 0.0
        %294 = vmatpush1.msra.mxu0 0.0
        %295 = vmatprep.subr.mxu0 0.0
        %296 = vmatpush1.msra.mxu0 0.0
        %297 = vmatprep.subr.mxu0 0.0
        %298 = vmatpush1.msra.mxu0 0.0
        %299 = vmatprep.subr.mxu0 0.0
        %300 = vmatpush1.msra.mxu0 0.0
        %301 = vmatprep.subr.mxu0 0.0
        %302 = vmatpush1.msra.mxu0 0.0
        %303 = vmatprep.subr.mxu0 0.0
        %304 = vmatpush1.msra.mxu0 0.0
        %305 = vmatprep.subr.mxu0 0.0
        %306 = vmatpush1.msra.mxu0 0.0
        %307 = vmatprep.subr.mxu0 0.0
        %308 = vmatpush1.msra.mxu0 0.0
        %309 = vmatprep.subr.mxu0 0.0
        %310 = vmatpush1.msra.mxu0 0.0
        %311 = vmatprep.subr.mxu0 0.0
        %312 = vmatpush1.msra.mxu0 0.0
        %313 = vmatprep.subr.mxu0 0.0
        %314 = vmatpush1.msra.mxu0 0.0
        %315 = vmatprep.subr.mxu0 0.0
        %316 = vmatpush1.msra.mxu0 0.0
        %317 = vmatprep.subr.mxu0 0.0
        %v318 = vand.u32 %v207, 4294901760
        %v319 = vsub.f32 %v207, %v318
        %v320 = vand.u32 %v319, 4294901760
        %v321 = vsub.f32 %v319, %v320
        %v322 = vand.u32 %v321, 4294901760
        %323 = vmatpush1.msra.mxu0 %v322
        %324 = vmatprep.subr.mxu0 0.0
        %v325 = vand.u32 %v206, 4294901760
        %v326 = vsub.f32 %v206, %v325
        %v327 = vand.u32 %v326, 4294901760
        %v328 = vsub.f32 %v326, %v327
        %v329 = vand.u32 %v328, 4294901760
        %330 = vmatpush1.msra.mxu0 %v329
        %331 = vmatprep.subr.mxu0 0.0
        %332 = vmatpush2.msra.mxu0 0.0
        %333 = vmatprep.subr.mxu0 0.0
        %334 = vmatpush2.msra.mxu0 0.0
        %335 = vmatprep.subr.mxu0 0.0
        %336 = vmatpush2.msra.mxu0 0.0
        %337 = vmatprep.subr.mxu0 0.0
        %338 = vmatpush2.msra.mxu0 0.0
        %339 = vmatprep.subr.mxu0 0.0
        %340 = vmatpush2.msra.mxu0 0.0
        %341 = vmatprep.subr.mxu0 0.0
        %342 = vmatpush2.msra.mxu0 0.0
        %343 = vmatprep.subr.mxu0 0.0
        %344 = vmatpush2.msra.mxu0 0.0
        %345 = vmatprep.subr.mxu0 0.0
        %346 = vmatpush2.msra.mxu0 0.0
        %347 = vmatprep.subr.mxu0 0.0
        %348 = vmatpush2.msra.mxu0 0.0
        %349 = vmatprep.subr.mxu0 0.0
        %350 = vmatpush2.msra.mxu0 0.0
        %351 = vmatprep.subr.mxu0 0.0
        %352 = vmatpush2.msra.mxu0 0.0
        %353 = vmatprep.subr.mxu0 0.0
        %354 = vmatpush2.msra.mxu0 0.0
        %355 = vmatprep.subr.mxu0 0.0
        %356 = vmatpush2.msra.mxu0 0.0
        %357 = vmatprep.subr.mxu0 0.0
        %358 = vmatpush2.msra.mxu0 0.0
        %359 = vmatprep.subr.mxu0 0.0
        %360 = vmatpush2.msra.mxu0 0.0
        %361 = vmatprep.subr.mxu0 0.0
        %362 = vmatpush2.msra.mxu0 0.0
        %363 = vmatprep.mubr.f32.mxu0 0.0
        %v364 = vand.u32 %v210, 4294901760
        %365 = vmatmul.mubr.f32.gmra.mxu0 %v364
        %v366 = vpop.f32.mrf.mxu0
        %v367 = vadd.f32 %v286, %v366
        %v368 = vpop.f32.mrf.mxu0
        %369 = vdwg.mxu0
        %370 = vmatprep.subr.mxu0 0.0
        %371 = vmatpush1.msra.mxu0 0.0
        %372 = vmatprep.subr.mxu0 0.0
        %373 = vmatpush1.msra.mxu0 0.0
        %374 = vmatprep.subr.mxu0 0.0
        %375 = vmatpush1.msra.mxu0 0.0
        %376 = vmatprep.subr.mxu0 0.0
        %377 = vmatpush1.msra.mxu0 0.0
        %378 = vmatprep.subr.mxu0 0.0
        %379 = vmatpush1.msra.mxu0 0.0
        %380 = vmatprep.subr.mxu0 0.0
        %381 = vmatpush1.msra.mxu0 0.0
        %382 = vmatprep.subr.mxu0 0.0
        %383 = vmatpush1.msra.mxu0 0.0
        %384 = vmatprep.subr.mxu0 0.0
        %385 = vmatpush1.msra.mxu0 0.0
        %386 = vmatprep.subr.mxu0 0.0
        %387 = vmatpush1.msra.mxu0 0.0
        %388 = vmatprep.subr.mxu0 0.0
        %389 = vmatpush1.msra.mxu0 0.0
        %390 = vmatprep.subr.mxu0 0.0
        %391 = vmatpush1.msra.mxu0 0.0
        %392 = vmatprep.subr.mxu0 0.0
        %393 = vmatpush1.msra.mxu0 0.0
        %394 = vmatprep.subr.mxu0 0.0
        %395 = vmatpush1.msra.mxu0 0.0
        %396 = vmatprep.subr.mxu0 0.0
        %397 = vmatpush1.msra.mxu0 0.0
        %398 = vmatprep.subr.mxu0 0.0
        %v399 = vand.u32 %v207, 4294901760
        %v400 = vsub.f32 %v207, %v399
        %401 = vmatpush1.msra.mxu0 %v400
        %402 = vmatprep.subr.mxu0 0.0
        %v403 = vand.u32 %v206, 4294901760
        %v404 = vsub.f32 %v206, %v403
        %405 = vmatpush1.msra.mxu0 %v404
        %406 = vmatprep.subr.mxu0 0.0
        %407 = vmatpush2.msra.mxu0 0.0
        %408 = vmatprep.subr.mxu0 0.0
        %409 = vmatpush2.msra.mxu0 0.0
        %410 = vmatprep.subr.mxu0 0.0
        %411 = vmatpush2.msra.mxu0 0.0
        %412 = vmatprep.subr.mxu0 0.0
        %413 = vmatpush2.msra.mxu0 0.0
        %414 = vmatprep.subr.mxu0 0.0
        %415 = vmatpush2.msra.mxu0 0.0
        %416 = vmatprep.subr.mxu0 0.0
        %417 = vmatpush2.msra.mxu0 0.0
        %418 = vmatprep.subr.mxu0 0.0
        %419 = vmatpush2.msra.mxu0 0.0
        %420 = vmatprep.subr.mxu0 0.0
        %421 = vmatpush2.msra.mxu0 0.0
        %422 = vmatprep.subr.mxu0 0.0
        %423 = vmatpush2.msra.mxu0 0.0
        %424 = vmatprep.subr.mxu0 0.0
        %425 = vmatpush2.msra.mxu0 0.0
        %426 = vmatprep.subr.mxu0 0.0
        %427 = vmatpush2.msra.mxu0 0.0
        %428 = vmatprep.subr.mxu0 0.0
        %429 = vmatpush2.msra.mxu0 0.0
        %430 = vmatprep.subr.mxu0 0.0
        %431 = vmatpush2.msra.mxu0 0.0
        %432 = vmatprep.subr.mxu0 0.0
        %433 = vmatpush2.msra.mxu0 0.0
        %434 = vmatprep.subr.mxu0 0.0
        %435 = vmatpush2.msra.mxu0 0.0
        %436 = vmatprep.subr.mxu0 0.0
        %437 = vmatpush2.msra.mxu0 0.0
        %438 = vmatprep.mubr.f32.mxu0 0.0
        %v439 = vand.u32 %v210, 4294901760
        %v440 = vsub.f32 %v210, %v439
        %441 = vmatmul.mubr.f32.gmra.mxu0 %v440
        %v442 = vpop.f32.mrf.mxu0
        %v443 = vadd.f32 %v367, %v442
        %v444 = vpop.f32.mrf.mxu0
        %445 = vdwg.mxu0
        %446 = vmatprep.subr.mxu0 0.0
        %447 = vmatpush1.msra.mxu0 0.0
        %448 = vmatprep.subr.mxu0 0.0
        %449 = vmatpush1.msra.mxu0 0.0
        %450 = vmatprep.subr.mxu0 0.0
        %451 = vmatpush1.msra.mxu0 0.0
        %452 = vmatprep.subr.mxu0 0.0
        %453 = vmatpush1.msra.mxu0 0.0
        %454 = vmatprep.subr.mxu0 0.0
        %455 = vmatpush1.msra.mxu0 0.0
        %456 = vmatprep.subr.mxu0 0.0
        %457 = vmatpush1.msra.mxu0 0.0
        %458 = vmatprep.subr.mxu0 0.0
        %459 = vmatpush1.msra.mxu0 0.0
        %460 = vmatprep.subr.mxu0 0.0
        %461 = vmatpush1.msra.mxu0 0.0
        %462 = vmatprep.subr.mxu0 0.0
        %463 = vmatpush1.msra.mxu0 0.0
        %464 = vmatprep.subr.mxu0 0.0
        %465 = vmatpush1.msra.mxu0 0.0
        %466 = vmatprep.subr.mxu0 0.0
        %467 = vmatpush1.msra.mxu0 0.0
        %468 = vmatprep.subr.mxu0 0.0
        %469 = vmatpush1.msra.mxu0 0.0
        %470 = vmatprep.subr.mxu0 0.0
        %471 = vmatpush1.msra.mxu0 0.0
        %472 = vmatprep.subr.mxu0 0.0
        %473 = vmatpush1.msra.mxu0 0.0
        %474 = vmatprep.subr.mxu0 0.0
        %v475 = vand.u32 %v207, 4294901760
        %476 = vmatpush1.msra.mxu0 %v475
        %477 = vmatprep.subr.mxu0 0.0
        %v478 = vand.u32 %v206, 4294901760
        %479 = vmatpush1.msra.mxu0 %v478
        %480 = vmatprep.subr.mxu0 0.0
        %481 = vmatpush2.msra.mxu0 0.0
        %482 = vmatprep.subr.mxu0 0.0
        %483 = vmatpush2.msra.mxu0 0.0
        %484 = vmatprep.subr.mxu0 0.0
        %485 = vmatpush2.msra.mxu0 0.0
        %486 = vmatprep.subr.mxu0 0.0
        %487 = vmatpush2.msra.mxu0 0.0
        %488 = vmatprep.subr.mxu0 0.0
        %489 = vmatpush2.msra.mxu0 0.0
        %490 = vmatprep.subr.mxu0 0.0
        %491 = vmatpush2.msra.mxu0 0.0
        %492 = vmatprep.subr.mxu0 0.0
        %493 = vmatpush2.msra.mxu0 0.0
        %494 = vmatprep.subr.mxu0 0.0
        %495 = vmatpush2.msra.mxu0 0.0
        %496 = vmatprep.subr.mxu0 0.0
        %497 = vmatpush2.msra.mxu0 0.0
        %498 = vmatprep.subr.mxu0 0.0
        %499 = vmatpush2.msra.mxu0 0.0
        %500 = vmatprep.subr.mxu0 0.0
        %501 = vmatpush2.msra.mxu0 0.0
        %502 = vmatprep.subr.mxu0 0.0
        %503 = vmatpush2.msra.mxu0 0.0
        %504 = vmatprep.subr.mxu0 0.0
        %505 = vmatpush2.msra.mxu0 0.0
        %506 = vmatprep.subr.mxu0 0.0
        %507 = vmatpush2.msra.mxu0 0.0
        %508 = vmatprep.subr.mxu0 0.0
        %509 = vmatpush2.msra.mxu0 0.0
        %510 = vmatprep.subr.mxu0 0.0
        %511 = vmatpush2.msra.mxu0 0.0
        %512 = vmatprep.mubr.f32.mxu0 0.0
        %v513 = vand.u32 %v210, 4294901760
        %v514 = vsub.f32 %v210, %v513
        %v515 = vand.u32 %v514, 4294901760
        %516 = vmatmul.mubr.f32.gmra.mxu0 %v515
        %v517 = vpop.f32.mrf.mxu0
        %v518 = vadd.f32 %v443, %v517
        %v519 = vpop.f32.mrf.mxu0
        %520 = vdwg.mxu0
        %521 = vmatprep.subr.mxu0 0.0
        %522 = vmatpush1.msra.mxu0 0.0
        %523 = vmatprep.subr.mxu0 0.0
        %524 = vmatpush1.msra.mxu0 0.0
        %525 = vmatprep.subr.mxu0 0.0
        %526 = vmatpush1.msra.mxu0 0.0
        %527 = vmatprep.subr.mxu0 0.0
        %528 = vmatpush1.msra.mxu0 0.0
        %529 = vmatprep.subr.mxu0 0.0
        %530 = vmatpush1.msra.mxu0 0.0
        %531 = vmatprep.subr.mxu0 0.0
        %532 = vmatpush1.msra.mxu0 0.0
        %533 = vmatprep.subr.mxu0 0.0
        %534 = vmatpush1.msra.mxu0 0.0
        %535 = vmatprep.subr.mxu0 0.0
        %536 = vmatpush1.msra.mxu0 0.0
        %537 = vmatprep.subr.mxu0 0.0
        %538 = vmatpush1.msra.mxu0 0.0
        %539 = vmatprep.subr.mxu0 0.0
        %540 = vmatpush1.msra.mxu0 0.0
        %541 = vmatprep.subr.mxu0 0.0
        %542 = vmatpush1.msra.mxu0 0.0
        %543 = vmatprep.subr.mxu0 0.0
        %544 = vmatpush1.msra.mxu0 0.0
        %545 = vmatprep.subr.mxu0 0.0
        %546 = vmatpush1.msra.mxu0 0.0
        %547 = vmatprep.subr.mxu0 0.0
        %548 = vmatpush1.msra.mxu0 0.0
        %549 = vmatprep.subr.mxu0 0.0
        %v550 = vand.u32 %v207, 4294901760
        %v551 = vsub.f32 %v207, %v550
        %v552 = vand.u32 %v551, 4294901760
        %553 = vmatpush1.msra.mxu0 %v552
        %554 = vmatprep.subr.mxu0 0.0
        %v555 = vand.u32 %v206, 4294901760
        %v556 = vsub.f32 %v206, %v555
        %v557 = vand.u32 %v556, 4294901760
        %558 = vmatpush1.msra.mxu0 %v557
        %559 = vmatprep.subr.mxu0 0.0
        %560 = vmatpush2.msra.mxu0 0.0
        %561 = vmatprep.subr.mxu0 0.0
        %562 = vmatpush2.msra.mxu0 0.0
        %563 = vmatprep.subr.mxu0 0.0
        %564 = vmatpush2.msra.mxu0 0.0
        %565 = vmatprep.subr.mxu0 0.0
        %566 = vmatpush2.msra.mxu0 0.0
        %567 = vmatprep.subr.mxu0 0.0
        %568 = vmatpush2.msra.mxu0 0.0
        %569 = vmatprep.subr.mxu0 0.0
        %570 = vmatpush2.msra.mxu0 0.0
        %571 = vmatprep.subr.mxu0 0.0
        %572 = vmatpush2.msra.mxu0 0.0
        %573 = vmatprep.subr.mxu0 0.0
        %574 = vmatpush2.msra.mxu0 0.0
        %575 = vmatprep.subr.mxu0 0.0
        %576 = vmatpush2.msra.mxu0 0.0
        %577 = vmatprep.subr.mxu0 0.0
        %578 = vmatpush2.msra.mxu0 0.0
        %579 = vmatprep.subr.mxu0 0.0
        %580 = vmatpush2.msra.mxu0 0.0
        %581 = vmatprep.subr.mxu0 0.0
        %582 = vmatpush2.msra.mxu0 0.0
        %583 = vmatprep.subr.mxu0 0.0
        %584 = vmatpush2.msra.mxu0 0.0
        %585 = vmatprep.subr.mxu0 0.0
        %586 = vmatpush2.msra.mxu0 0.0
        %587 = vmatprep.subr.mxu0 0.0
        %588 = vmatpush2.msra.mxu0 0.0
        %589 = vmatprep.subr.mxu0 0.0
        %590 = vmatpush2.msra.mxu0 0.0
        %591 = vmatprep.mubr.f32.mxu0 0.0
        %v592 = vand.u32 %v210, 4294901760
        %593 = vmatmul.mubr.f32.gmra.mxu0 %v592
        %v594 = vpop.f32.mrf.mxu0
        %v595 = vadd.f32 %v518, %v594
        %v596 = vpop.f32.mrf.mxu0
        %597 = vdwg.mxu0
        %598 = vmatprep.subr.mxu0 0.0
        %599 = vmatpush1.msra.mxu0 0.0
        %600 = vmatprep.subr.mxu0 0.0
        %601 = vmatpush1.msra.mxu0 0.0
        %602 = vmatprep.subr.mxu0 0.0
        %603 = vmatpush1.msra.mxu0 0.0
        %604 = vmatprep.subr.mxu0 0.0
        %605 = vmatpush1.msra.mxu0 0.0
        %606 = vmatprep.subr.mxu0 0.0
        %607 = vmatpush1.msra.mxu0 0.0
        %608 = vmatprep.subr.mxu0 0.0
        %609 = vmatpush1.msra.mxu0 0.0
        %610 = vmatprep.subr.mxu0 0.0
        %611 = vmatpush1.msra.mxu0 0.0
        %612 = vmatprep.subr.mxu0 0.0
        %613 = vmatpush1.msra.mxu0 0.0
        %614 = vmatprep.subr.mxu0 0.0
        %615 = vmatpush1.msra.mxu0 0.0
        %616 = vmatprep.subr.mxu0 0.0
        %617 = vmatpush1.msra.mxu0 0.0
        %618 = vmatprep.subr.mxu0 0.0
        %619 = vmatpush1.msra.mxu0 0.0
        %620 = vmatprep.subr.mxu0 0.0
        %621 = vmatpush1.msra.mxu0 0.0
        %622 = vmatprep.subr.mxu0 0.0
        %623 = vmatpush1.msra.mxu0 0.0
        %624 = vmatprep.subr.mxu0 0.0
        %625 = vmatpush1.msra.mxu0 0.0
        %626 = vmatprep.subr.mxu0 0.0
        %v627 = vand.u32 %v207, 4294901760
        %628 = vmatpush1.msra.mxu0 %v627
        %629 = vmatprep.subr.mxu0 0.0
        %v630 = vand.u32 %v206, 4294901760
        %631 = vmatpush1.msra.mxu0 %v630
        %632 = vmatprep.subr.mxu0 0.0
        %633 = vmatpush2.msra.mxu0 0.0
        %634 = vmatprep.subr.mxu0 0.0
        %635 = vmatpush2.msra.mxu0 0.0
        %636 = vmatprep.subr.mxu0 0.0
        %637 = vmatpush2.msra.mxu0 0.0
        %638 = vmatprep.subr.mxu0 0.0
        %639 = vmatpush2.msra.mxu0 0.0
        %640 = vmatprep.subr.mxu0 0.0
        %641 = vmatpush2.msra.mxu0 0.0
        %642 = vmatprep.subr.mxu0 0.0
        %643 = vmatpush2.msra.mxu0 0.0
        %644 = vmatprep.subr.mxu0 0.0
        %645 = vmatpush2.msra.mxu0 0.0
        %646 = vmatprep.subr.mxu0 0.0
        %647 = vmatpush2.msra.mxu0 0.0
        %648 = vmatprep.subr.mxu0 0.0
        %649 = vmatpush2.msra.mxu0 0.0
        %650 = vmatprep.subr.mxu0 0.0
        %651 = vmatpush2.msra.mxu0 0.0
        %652 = vmatprep.subr.mxu0 0.0
        %653 = vmatpush2.msra.mxu0 0.0
        %654 = vmatprep.subr.mxu0 0.0
        %655 = vmatpush2.msra.mxu0 0.0
        %656 = vmatprep.subr.mxu0 0.0
        %657 = vmatpush2.msra.mxu0 0.0
        %658 = vmatprep.subr.mxu0 0.0
        %659 = vmatpush2.msra.mxu0 0.0
        %660 = vmatprep.subr.mxu0 0.0
        %661 = vmatpush2.msra.mxu0 0.0
        %662 = vmatprep.subr.mxu0 0.0
        %663 = vmatpush2.msra.mxu0 0.0
        %664 = vmatprep.mubr.f32.mxu0 0.0
        %v665 = vand.u32 %v210, 4294901760
        %666 = vmatmul.mubr.f32.gmra.mxu0 %v665
        %v667 = vpop.f32.mrf.mxu0
        %v668 = vadd.f32 %v595, %v667
        %v669 = vpop.f32.mrf.mxu0
        %670 = vdwg.mxu0
        %vm671 = vcmask 60416
        %672 = vst.msk [vmem:[%s203] sm:$0xf] %vm671, %v668
        %674 = vrot.lane.b32.xlu0 %v668, 120
        %v675 = vpop.permute.xlu0 %674
        %s677 = scalar_lea.vmem %s203, 4 [#allocation7]
        %678 = vst.msk [vmem:[%s677] sm:$0xf] %vm671, %v675
        %v679 = vld [vmem:[%s179] sm:$0xf]
        %v680 = vld [vmem:[#allocation5] sm:$0xff]
        %v681 = vld [vmem:[#allocation5 + $0x8] sm:$0xff]
        %683 = vrot.lane.b32.xlu0 %v679, 112
        %v684 = vpop.permute.xlu0 %683
        %v685 = vsel %vm208, %v684, 0
        %687 = vmatprep.subr.mxu0 0.0
        %688 = vmatpush1.msra.mxu0 0.0
        %689 = vmatprep.subr.mxu0 0.0
        %690 = vmatpush1.msra.mxu0 0.0
        %691 = vmatprep.subr.mxu0 0.0
        %692 = vmatpush1.msra.mxu0 0.0
        %693 = vmatprep.subr.mxu0 0.0
        %694 = vmatpush1.msra.mxu0 0.0
        %695 = vmatprep.subr.mxu0 0.0
        %696 = vmatpush1.msra.mxu0 0.0
        %697 = vmatprep.subr.mxu0 0.0
        %698 = vmatpush1.msra.mxu0 0.0
        %699 = vmatprep.subr.mxu0 0.0
        %700 = vmatpush1.msra.mxu0 0.0
        %701 = vmatprep.subr.mxu0 0.0
        %702 = vmatpush1.msra.mxu0 0.0
        %703 = vmatprep.subr.mxu0 0.0
        %704 = vmatpush1.msra.mxu0 0.0
        %705 = vmatprep.subr.mxu0 0.0
        %706 = vmatpush1.msra.mxu0 0.0
        %707 = vmatprep.subr.mxu0 0.0
        %708 = vmatpush1.msra.mxu0 0.0
        %709 = vmatprep.subr.mxu0 0.0
        %710 = vmatpush1.msra.mxu0 0.0
        %711 = vmatprep.subr.mxu0 0.0
        %712 = vmatpush1.msra.mxu0 0.0
        %713 = vmatprep.subr.mxu0 0.0
        %714 = vmatpush1.msra.mxu0 0.0
        %715 = vmatprep.subr.mxu0 0.0
        %v716 = vand.u32 %v681, 4294901760
        %717 = vmatpush1.msra.mxu0 %v716
        %718 = vmatprep.subr.mxu0 0.0
        %v719 = vand.u32 %v680, 4294901760
        %720 = vmatpush1.msra.mxu0 %v719
        %721 = vmatprep.subr.mxu0 0.0
        %722 = vmatpush2.msra.mxu0 0.0
        %723 = vmatprep.subr.mxu0 0.0
        %724 = vmatpush2.msra.mxu0 0.0
        %725 = vmatprep.subr.mxu0 0.0
        %726 = vmatpush2.msra.mxu0 0.0
        %727 = vmatprep.subr.mxu0 0.0
        %728 = vmatpush2.msra.mxu0 0.0
        %729 = vmatprep.subr.mxu0 0.0
        %730 = vmatpush2.msra.mxu0 0.0
        %731 = vmatprep.subr.mxu0 0.0
        %732 = vmatpush2.msra.mxu0 0.0
        %733 = vmatprep.subr.mxu0 0.0
        %734 = vmatpush2.msra.mxu0 0.0
        %735 = vmatprep.subr.mxu0 0.0
        %736 = vmatpush2.msra.mxu0 0.0
        %737 = vmatprep.subr.mxu0 0.0
        %738 = vmatpush2.msra.mxu0 0.0
        %739 = vmatprep.subr.mxu0 0.0
        %740 = vmatpush2.msra.mxu0 0.0
        %741 = vmatprep.subr.mxu0 0.0
        %742 = vmatpush2.msra.mxu0 0.0
        %743 = vmatprep.subr.mxu0 0.0
        %744 = vmatpush2.msra.mxu0 0.0
        %745 = vmatprep.subr.mxu0 0.0
        %746 = vmatpush2.msra.mxu0 0.0
        %747 = vmatprep.subr.mxu0 0.0
        %748 = vmatpush2.msra.mxu0 0.0
        %749 = vmatprep.subr.mxu0 0.0
        %750 = vmatpush2.msra.mxu0 0.0
        %751 = vmatprep.subr.mxu0 0.0
        %752 = vmatpush2.msra.mxu0 0.0
        %753 = vmatprep.mubr.f32.mxu0 0.0
        %v754 = vand.u32 %v685, 4294901760
        %v755 = vsub.f32 %v685, %v754
        %v756 = vand.u32 %v755, 4294901760
        %v757 = vsub.f32 %v755, %v756
        %v758 = vand.u32 %v757, 4294901760
        %759 = vmatmul.mubr.f32.gmra.mxu0 %v758
        %v760 = vpop.f32.mrf.mxu0
        %v761 = vadd.f32 0.0, %v760
        %v762 = vpop.f32.mrf.mxu0
        %763 = vdwg.mxu0
        %764 = vmatprep.subr.mxu0 0.0
        %765 = vmatpush1.msra.mxu0 0.0
        %766 = vmatprep.subr.mxu0 0.0
        %767 = vmatpush1.msra.mxu0 0.0
        %768 = vmatprep.subr.mxu0 0.0
        %769 = vmatpush1.msra.mxu0 0.0
        %770 = vmatprep.subr.mxu0 0.0
        %771 = vmatpush1.msra.mxu0 0.0
        %772 = vmatprep.subr.mxu0 0.0
        %773 = vmatpush1.msra.mxu0 0.0
        %774 = vmatprep.subr.mxu0 0.0
        %775 = vmatpush1.msra.mxu0 0.0
        %776 = vmatprep.subr.mxu0 0.0
        %777 = vmatpush1.msra.mxu0 0.0
        %778 = vmatprep.subr.mxu0 0.0
        %779 = vmatpush1.msra.mxu0 0.0
        %780 = vmatprep.subr.mxu0 0.0
        %781 = vmatpush1.msra.mxu0 0.0
        %782 = vmatprep.subr.mxu0 0.0
        %783 = vmatpush1.msra.mxu0 0.0
        %784 = vmatprep.subr.mxu0 0.0
        %785 = vmatpush1.msra.mxu0 0.0
        %786 = vmatprep.subr.mxu0 0.0
        %787 = vmatpush1.msra.mxu0 0.0
        %788 = vmatprep.subr.mxu0 0.0
        %789 = vmatpush1.msra.mxu0 0.0
        %790 = vmatprep.subr.mxu0 0.0
        %791 = vmatpush1.msra.mxu0 0.0
        %792 = vmatprep.subr.mxu0 0.0
        %v793 = vand.u32 %v681, 4294901760
        %v794 = vsub.f32 %v681, %v793
        %v795 = vand.u32 %v794, 4294901760
        %v796 = vsub.f32 %v794, %v795
        %v797 = vand.u32 %v796, 4294901760
        %798 = vmatpush1.msra.mxu0 %v797
        %799 = vmatprep.subr.mxu0 0.0
        %v800 = vand.u32 %v680, 4294901760
        %v801 = vsub.f32 %v680, %v800
        %v802 = vand.u32 %v801, 4294901760
        %v803 = vsub.f32 %v801, %v802
        %v804 = vand.u32 %v803, 4294901760
        %805 = vmatpush1.msra.mxu0 %v804
        %806 = vmatprep.subr.mxu0 0.0
        %807 = vmatpush2.msra.mxu0 0.0
        %808 = vmatprep.subr.mxu0 0.0
        %809 = vmatpush2.msra.mxu0 0.0
        %810 = vmatprep.subr.mxu0 0.0
        %811 = vmatpush2.msra.mxu0 0.0
        %812 = vmatprep.subr.mxu0 0.0
        %813 = vmatpush2.msra.mxu0 0.0
        %814 = vmatprep.subr.mxu0 0.0
        %815 = vmatpush2.msra.mxu0 0.0
        %816 = vmatprep.subr.mxu0 0.0
        %817 = vmatpush2.msra.mxu0 0.0
        %818 = vmatprep.subr.mxu0 0.0
        %819 = vmatpush2.msra.mxu0 0.0
        %820 = vmatprep.subr.mxu0 0.0
        %821 = vmatpush2.msra.mxu0 0.0
        %822 = vmatprep.subr.mxu0 0.0
        %823 = vmatpush2.msra.mxu0 0.0
        %824 = vmatprep.subr.mxu0 0.0
        %825 = vmatpush2.msra.mxu0 0.0
        %826 = vmatprep.subr.mxu0 0.0
        %827 = vmatpush2.msra.mxu0 0.0
        %828 = vmatprep.subr.mxu0 0.0
        %829 = vmatpush2.msra.mxu0 0.0
        %830 = vmatprep.subr.mxu0 0.0
        %831 = vmatpush2.msra.mxu0 0.0
        %832 = vmatprep.subr.mxu0 0.0
        %833 = vmatpush2.msra.mxu0 0.0
        %834 = vmatprep.subr.mxu0 0.0
        %835 = vmatpush2.msra.mxu0 0.0
        %836 = vmatprep.subr.mxu0 0.0
        %837 = vmatpush2.msra.mxu0 0.0
        %838 = vmatprep.mubr.f32.mxu0 0.0
        %v839 = vand.u32 %v685, 4294901760
        %840 = vmatmul.mubr.f32.gmra.mxu0 %v839
        %v841 = vpop.f32.mrf.mxu0
        %v842 = vadd.f32 %v761, %v841
        %v843 = vpop.f32.mrf.mxu0
        %844 = vdwg.mxu0
        %845 = vmatprep.subr.mxu0 0.0
        %846 = vmatpush1.msra.mxu0 0.0
        %847 = vmatprep.subr.mxu0 0.0
        %848 = vmatpush1.msra.mxu0 0.0
        %849 = vmatprep.subr.mxu0 0.0
        %850 = vmatpush1.msra.mxu0 0.0
        %851 = vmatprep.subr.mxu0 0.0
        %852 = vmatpush1.msra.mxu0 0.0
        %853 = vmatprep.subr.mxu0 0.0
        %854 = vmatpush1.msra.mxu0 0.0
        %855 = vmatprep.subr.mxu0 0.0
        %856 = vmatpush1.msra.mxu0 0.0
        %857 = vmatprep.subr.mxu0 0.0
        %858 = vmatpush1.msra.mxu0 0.0
        %859 = vmatprep.subr.mxu0 0.0
        %860 = vmatpush1.msra.mxu0 0.0
        %861 = vmatprep.subr.mxu0 0.0
        %862 = vmatpush1.msra.mxu0 0.0
        %863 = vmatprep.subr.mxu0 0.0
        %864 = vmatpush1.msra.mxu0 0.0
        %865 = vmatprep.subr.mxu0 0.0
        %866 = vmatpush1.msra.mxu0 0.0
        %867 = vmatprep.subr.mxu0 0.0
        %868 = vmatpush1.msra.mxu0 0.0
        %869 = vmatprep.subr.mxu0 0.0
        %870 = vmatpush1.msra.mxu0 0.0
        %871 = vmatprep.subr.mxu0 0.0
        %872 = vmatpush1.msra.mxu0 0.0
        %873 = vmatprep.subr.mxu0 0.0
        %v874 = vand.u32 %v681, 4294901760
        %v875 = vsub.f32 %v681, %v874
        %876 = vmatpush1.msra.mxu0 %v875
        %877 = vmatprep.subr.mxu0 0.0
        %v878 = vand.u32 %v680, 4294901760
        %v879 = vsub.f32 %v680, %v878
        %880 = vmatpush1.msra.mxu0 %v879
        %881 = vmatprep.subr.mxu0 0.0
        %882 = vmatpush2.msra.mxu0 0.0
        %883 = vmatprep.subr.mxu0 0.0
        %884 = vmatpush2.msra.mxu0 0.0
        %885 = vmatprep.subr.mxu0 0.0
        %886 = vmatpush2.msra.mxu0 0.0
        %887 = vmatprep.subr.mxu0 0.0
        %888 = vmatpush2.msra.mxu0 0.0
        %889 = vmatprep.subr.mxu0 0.0
        %890 = vmatpush2.msra.mxu0 0.0
        %891 = vmatprep.subr.mxu0 0.0
        %892 = vmatpush2.msra.mxu0 0.0
        %893 = vmatprep.subr.mxu0 0.0
        %894 = vmatpush2.msra.mxu0 0.0
        %895 = vmatprep.subr.mxu0 0.0
        %896 = vmatpush2.msra.mxu0 0.0
        %897 = vmatprep.subr.mxu0 0.0
        %898 = vmatpush2.msra.mxu0 0.0
        %899 = vmatprep.subr.mxu0 0.0
        %900 = vmatpush2.msra.mxu0 0.0
        %901 = vmatprep.subr.mxu0 0.0
        %902 = vmatpush2.msra.mxu0 0.0
        %903 = vmatprep.subr.mxu0 0.0
        %904 = vmatpush2.msra.mxu0 0.0
        %905 = vmatprep.subr.mxu0 0.0
        %906 = vmatpush2.msra.mxu0 0.0
        %907 = vmatprep.subr.mxu0 0.0
        %908 = vmatpush2.msra.mxu0 0.0
        %909 = vmatprep.subr.mxu0 0.0
        %910 = vmatpush2.msra.mxu0 0.0
        %911 = vmatprep.subr.mxu0 0.0
        %912 = vmatpush2.msra.mxu0 0.0
        %913 = vmatprep.mubr.f32.mxu0 0.0
        %v914 = vand.u32 %v685, 4294901760
        %v915 = vsub.f32 %v685, %v914
        %916 = vmatmul.mubr.f32.gmra.mxu0 %v915
        %v917 = vpop.f32.mrf.mxu0
        %v918 = vadd.f32 %v842, %v917
        %v919 = vpop.f32.mrf.mxu0
        %920 = vdwg.mxu0
        %921 = vmatprep.subr.mxu0 0.0
        %922 = vmatpush1.msra.mxu0 0.0
        %923 = vmatprep.subr.mxu0 0.0
        %924 = vmatpush1.msra.mxu0 0.0
        %925 = vmatprep.subr.mxu0 0.0
        %926 = vmatpush1.msra.mxu0 0.0
        %927 = vmatprep.subr.mxu0 0.0
        %928 = vmatpush1.msra.mxu0 0.0
        %929 = vmatprep.subr.mxu0 0.0
        %930 = vmatpush1.msra.mxu0 0.0
        %931 = vmatprep.subr.mxu0 0.0
        %932 = vmatpush1.msra.mxu0 0.0
        %933 = vmatprep.subr.mxu0 0.0
        %934 = vmatpush1.msra.mxu0 0.0
        %935 = vmatprep.subr.mxu0 0.0
        %936 = vmatpush1.msra.mxu0 0.0
        %937 = vmatprep.subr.mxu0 0.0
        %938 = vmatpush1.msra.mxu0 0.0
        %939 = vmatprep.subr.mxu0 0.0
        %940 = vmatpush1.msra.mxu0 0.0
        %941 = vmatprep.subr.mxu0 0.0
        %942 = vmatpush1.msra.mxu0 0.0
        %943 = vmatprep.subr.mxu0 0.0
        %944 = vmatpush1.msra.mxu0 0.0
        %945 = vmatprep.subr.mxu0 0.0
        %946 = vmatpush1.msra.mxu0 0.0
        %947 = vmatprep.subr.mxu0 0.0
        %948 = vmatpush1.msra.mxu0 0.0
        %949 = vmatprep.subr.mxu0 0.0
        %v950 = vand.u32 %v681, 4294901760
        %951 = vmatpush1.msra.mxu0 %v950
        %952 = vmatprep.subr.mxu0 0.0
        %v953 = vand.u32 %v680, 4294901760
        %954 = vmatpush1.msra.mxu0 %v953
        %955 = vmatprep.subr.mxu0 0.0
        %956 = vmatpush2.msra.mxu0 0.0
        %957 = vmatprep.subr.mxu0 0.0
        %958 = vmatpush2.msra.mxu0 0.0
        %959 = vmatprep.subr.mxu0 0.0
        %960 = vmatpush2.msra.mxu0 0.0
        %961 = vmatprep.subr.mxu0 0.0
        %962 = vmatpush2.msra.mxu0 0.0
        %963 = vmatprep.subr.mxu0 0.0
        %964 = vmatpush2.msra.mxu0 0.0
        %965 = vmatprep.subr.mxu0 0.0
        %966 = vmatpush2.msra.mxu0 0.0
        %967 = vmatprep.subr.mxu0 0.0
        %968 = vmatpush2.msra.mxu0 0.0
        %969 = vmatprep.subr.mxu0 0.0
        %970 = vmatpush2.msra.mxu0 0.0
        %971 = vmatprep.subr.mxu0 0.0
        %972 = vmatpush2.msra.mxu0 0.0
        %973 = vmatprep.subr.mxu0 0.0
        %974 = vmatpush2.msra.mxu0 0.0
        %975 = vmatprep.subr.mxu0 0.0
        %976 = vmatpush2.msra.mxu0 0.0
        %977 = vmatprep.subr.mxu0 0.0
        %978 = vmatpush2.msra.mxu0 0.0
        %979 = vmatprep.subr.mxu0 0.0
        %980 = vmatpush2.msra.mxu0 0.0
        %981 = vmatprep.subr.mxu0 0.0
        %982 = vmatpush2.msra.mxu0 0.0
        %983 = vmatprep.subr.mxu0 0.0
        %984 = vmatpush2.msra.mxu0 0.0
        %985 = vmatprep.subr.mxu0 0.0
        %986 = vmatpush2.msra.mxu0 0.0
        %987 = vmatprep.mubr.f32.mxu0 0.0
        %v988 = vand.u32 %v685, 4294901760
        %v989 = vsub.f32 %v685, %v988
        %v990 = vand.u32 %v989, 4294901760
        %991 = vmatmul.mubr.f32.gmra.mxu0 %v990
        %v992 = vpop.f32.mrf.mxu0
        %v993 = vadd.f32 %v918, %v992
        %v994 = vpop.f32.mrf.mxu0
        %995 = vdwg.mxu0
        %996 = vmatprep.subr.mxu0 0.0
        %997 = vmatpush1.msra.mxu0 0.0
        %998 = vmatprep.subr.mxu0 0.0
        %999 = vmatpush1.msra.mxu0 0.0
        %1000 = vmatprep.subr.mxu0 0.0
        %1001 = vmatpush1.msra.mxu0 0.0
        %1002 = vmatprep.subr.mxu0 0.0
        %1003 = vmatpush1.msra.mxu0 0.0
        %1004 = vmatprep.subr.mxu0 0.0
        %1005 = vmatpush1.msra.mxu0 0.0
        %1006 = vmatprep.subr.mxu0 0.0
        %1007 = vmatpush1.msra.mxu0 0.0
        %1008 = vmatprep.subr.mxu0 0.0
        %1009 = vmatpush1.msra.mxu0 0.0
        %1010 = vmatprep.subr.mxu0 0.0
        %1011 = vmatpush1.msra.mxu0 0.0
        %1012 = vmatprep.subr.mxu0 0.0
        %1013 = vmatpush1.msra.mxu0 0.0
        %1014 = vmatprep.subr.mxu0 0.0
        %1015 = vmatpush1.msra.mxu0 0.0
        %1016 = vmatprep.subr.mxu0 0.0
        %1017 = vmatpush1.msra.mxu0 0.0
        %1018 = vmatprep.subr.mxu0 0.0
        %1019 = vmatpush1.msra.mxu0 0.0
        %1020 = vmatprep.subr.mxu0 0.0
        %1021 = vmatpush1.msra.mxu0 0.0
        %1022 = vmatprep.subr.mxu0 0.0
        %1023 = vmatpush1.msra.mxu0 0.0
        %1024 = vmatprep.subr.mxu0 0.0
        %v1025 = vand.u32 %v681, 4294901760
        %v1026 = vsub.f32 %v681, %v1025
        %v1027 = vand.u32 %v1026, 4294901760
        %1028 = vmatpush1.msra.mxu0 %v1027
        %1029 = vmatprep.subr.mxu0 0.0
        %v1030 = vand.u32 %v680, 4294901760
        %v1031 = vsub.f32 %v680, %v1030
        %v1032 = vand.u32 %v1031, 4294901760
        %1033 = vmatpush1.msra.mxu0 %v1032
        %1034 = vmatprep.subr.mxu0 0.0
        %1035 = vmatpush2.msra.mxu0 0.0
        %1036 = vmatprep.subr.mxu0 0.0
        %1037 = vmatpush2.msra.mxu0 0.0
        %1038 = vmatprep.subr.mxu0 0.0
        %1039 = vmatpush2.msra.mxu0 0.0
        %1040 = vmatprep.subr.mxu0 0.0
        %1041 = vmatpush2.msra.mxu0 0.0
        %1042 = vmatprep.subr.mxu0 0.0
        %1043 = vmatpush2.msra.mxu0 0.0
        %1044 = vmatprep.subr.mxu0 0.0
        %1045 = vmatpush2.msra.mxu0 0.0
        %1046 = vmatprep.subr.mxu0 0.0
        %1047 = vmatpush2.msra.mxu0 0.0
        %1048 = vmatprep.subr.mxu0 0.0
        %1049 = vmatpush2.msra.mxu0 0.0
        %1050 = vmatprep.subr.mxu0 0.0
        %1051 = vmatpush2.msra.mxu0 0.0
        %1052 = vmatprep.subr.mxu0 0.0
        %1053 = vmatpush2.msra.mxu0 0.0
        %1054 = vmatprep.subr.mxu0 0.0
        %1055 = vmatpush2.msra.mxu0 0.0
        %1056 = vmatprep.subr.mxu0 0.0
        %1057 = vmatpush2.msra.mxu0 0.0
        %1058 = vmatprep.subr.mxu0 0.0
        %1059 = vmatpush2.msra.mxu0 0.0
        %1060 = vmatprep.subr.mxu0 0.0
        %1061 = vmatpush2.msra.mxu0 0.0
        %1062 = vmatprep.subr.mxu0 0.0
        %1063 = vmatpush2.msra.mxu0 0.0
        %1064 = vmatprep.subr.mxu0 0.0
        %1065 = vmatpush2.msra.mxu0 0.0
        %1066 = vmatprep.mubr.f32.mxu0 0.0
        %v1067 = vand.u32 %v685, 4294901760
        %1068 = vmatmul.mubr.f32.gmra.mxu0 %v1067
        %v1069 = vpop.f32.mrf.mxu0
        %v1070 = vadd.f32 %v993, %v1069
        %v1071 = vpop.f32.mrf.mxu0
        %1072 = vdwg.mxu0
        %1073 = vmatprep.subr.mxu0 0.0
        %1074 = vmatpush1.msra.mxu0 0.0
        %1075 = vmatprep.subr.mxu0 0.0
        %1076 = vmatpush1.msra.mxu0 0.0
        %1077 = vmatprep.subr.mxu0 0.0
        %1078 = vmatpush1.msra.mxu0 0.0
        %1079 = vmatprep.subr.mxu0 0.0
        %1080 = vmatpush1.msra.mxu0 0.0
        %1081 = vmatprep.subr.mxu0 0.0
        %1082 = vmatpush1.msra.mxu0 0.0
        %1083 = vmatprep.subr.mxu0 0.0
        %1084 = vmatpush1.msra.mxu0 0.0
        %1085 = vmatprep.subr.mxu0 0.0
        %1086 = vmatpush1.msra.mxu0 0.0
        %1087 = vmatprep.subr.mxu0 0.0
        %1088 = vmatpush1.msra.mxu0 0.0
        %1089 = vmatprep.subr.mxu0 0.0
        %1090 = vmatpush1.msra.mxu0 0.0
        %1091 = vmatprep.subr.mxu0 0.0
        %1092 = vmatpush1.msra.mxu0 0.0
        %1093 = vmatprep.subr.mxu0 0.0
        %1094 = vmatpush1.msra.mxu0 0.0
        %1095 = vmatprep.subr.mxu0 0.0
        %1096 = vmatpush1.msra.mxu0 0.0
        %1097 = vmatprep.subr.mxu0 0.0
        %1098 = vmatpush1.msra.mxu0 0.0
        %1099 = vmatprep.subr.mxu0 0.0
        %1100 = vmatpush1.msra.mxu0 0.0
        %1101 = vmatprep.subr.mxu0 0.0
        %v1102 = vand.u32 %v681, 4294901760
        %1103 = vmatpush1.msra.mxu0 %v1102
        %1104 = vmatprep.subr.mxu0 0.0
        %v1105 = vand.u32 %v680, 4294901760
        %1106 = vmatpush1.msra.mxu0 %v1105
        %1107 = vmatprep.subr.mxu0 0.0
        %1108 = vmatpush2.msra.mxu0 0.0
        %1109 = vmatprep.subr.mxu0 0.0
        %1110 = vmatpush2.msra.mxu0 0.0
        %1111 = vmatprep.subr.mxu0 0.0
        %1112 = vmatpush2.msra.mxu0 0.0
        %1113 = vmatprep.subr.mxu0 0.0
        %1114 = vmatpush2.msra.mxu0 0.0
        %1115 = vmatprep.subr.mxu0 0.0
        %1116 = vmatpush2.msra.mxu0 0.0
        %1117 = vmatprep.subr.mxu0 0.0
        %1118 = vmatpush2.msra.mxu0 0.0
        %1119 = vmatprep.subr.mxu0 0.0
        %1120 = vmatpush2.msra.mxu0 0.0
        %1121 = vmatprep.subr.mxu0 0.0
        %1122 = vmatpush2.msra.mxu0 0.0
        %1123 = vmatprep.subr.mxu0 0.0
        %1124 = vmatpush2.msra.mxu0 0.0
        %1125 = vmatprep.subr.mxu0 0.0
        %1126 = vmatpush2.msra.mxu0 0.0
        %1127 = vmatprep.subr.mxu0 0.0
        %1128 = vmatpush2.msra.mxu0 0.0
        %1129 = vmatprep.subr.mxu0 0.0
        %1130 = vmatpush2.msra.mxu0 0.0
        %1131 = vmatprep.subr.mxu0 0.0
        %1132 = vmatpush2.msra.mxu0 0.0
        %1133 = vmatprep.subr.mxu0 0.0
        %1134 = vmatpush2.msra.mxu0 0.0
        %1135 = vmatprep.subr.mxu0 0.0
        %1136 = vmatpush2.msra.mxu0 0.0
        %1137 = vmatprep.subr.mxu0 0.0
        %1138 = vmatpush2.msra.mxu0 0.0
        %1139 = vmatprep.mubr.f32.mxu0 0.0
        %v1140 = vand.u32 %v685, 4294901760
        %1141 = vmatmul.mubr.f32.gmra.mxu0 %v1140
        %v1142 = vpop.f32.mrf.mxu0
        %v1143 = vadd.f32 %v1070, %v1142
        %v1144 = vpop.f32.mrf.mxu0
        %1145 = vdwg.mxu0
        %1147 = vrot.lane.b32.xlu0 %v1143, 8
        %v1148 = vpop.permute.xlu0 %1147
        %vm1150 = vcmask 126016
        %1151 = vst.msk [vmem:[%s203] sm:$0xf] %vm1150, %v1148
        %1152 = vst.msk [vmem:[%s677] sm:$0xf] %vm1150, %v1143
        %v1153 = vld [vmem:[%s179] sm:$0xf]
        %v1154 = vld [vmem:[#allocation5] sm:$0xff]
        %v1155 = vld [vmem:[#allocation5 + $0x8] sm:$0xff]
        %1157 = vrot.lane.b32.xlu0 %v1153, 96
        %v1158 = vpop.permute.xlu0 %1157
        %v1159 = vsel %vm208, %v1158, 0
        %1161 = vmatprep.subr.mxu0 0.0
        %1162 = vmatpush1.msra.mxu0 0.0
        %1163 = vmatprep.subr.mxu0 0.0
        %1164 = vmatpush1.msra.mxu0 0.0
        %1165 = vmatprep.subr.mxu0 0.0
        %1166 = vmatpush1.msra.mxu0 0.0
        %1167 = vmatprep.subr.mxu0 0.0
        %1168 = vmatpush1.msra.mxu0 0.0
        %1169 = vmatprep.subr.mxu0 0.0
        %1170 = vmatpush1.msra.mxu0 0.0
        %1171 = vmatprep.subr.mxu0 0.0
        %1172 = vmatpush1.msra.mxu0 0.0
        %1173 = vmatprep.subr.mxu0 0.0
        %1174 = vmatpush1.msra.mxu0 0.0
        %1175 = vmatprep.subr.mxu0 0.0
        %1176 = vmatpush1.msra.mxu0 0.0
        %1177 = vmatprep.subr.mxu0 0.0
        %1178 = vmatpush1.msra.mxu0 0.0
        %1179 = vmatprep.subr.mxu0 0.0
        %1180 = vmatpush1.msra.mxu0 0.0
        %1181 = vmatprep.subr.mxu0 0.0
        %1182 = vmatpush1.msra.mxu0 0.0
        %1183 = vmatprep.subr.mxu0 0.0
        %1184 = vmatpush1.msra.mxu0 0.0
        %1185 = vmatprep.subr.mxu0 0.0
        %1186 = vmatpush1.msra.mxu0 0.0
        %1187 = vmatprep.subr.mxu0 0.0
        %1188 = vmatpush1.msra.mxu0 0.0
        %1189 = vmatprep.subr.mxu0 0.0
        %v1190 = vand.u32 %v1155, 4294901760
        %1191 = vmatpush1.msra.mxu0 %v1190
        %1192 = vmatprep.subr.mxu0 0.0
        %v1193 = vand.u32 %v1154, 4294901760
        %1194 = vmatpush1.msra.mxu0 %v1193
        %1195 = vmatprep.subr.mxu0 0.0
        %1196 = vmatpush2.msra.mxu0 0.0
        %1197 = vmatprep.subr.mxu0 0.0
        %1198 = vmatpush2.msra.mxu0 0.0
        %1199 = vmatprep.subr.mxu0 0.0
        %1200 = vmatpush2.msra.mxu0 0.0
        %1201 = vmatprep.subr.mxu0 0.0
        %1202 = vmatpush2.msra.mxu0 0.0
        %1203 = vmatprep.subr.mxu0 0.0
        %1204 = vmatpush2.msra.mxu0 0.0
        %1205 = vmatprep.subr.mxu0 0.0
        %1206 = vmatpush2.msra.mxu0 0.0
        %1207 = vmatprep.subr.mxu0 0.0
        %1208 = vmatpush2.msra.mxu0 0.0
        %1209 = vmatprep.subr.mxu0 0.0
        %1210 = vmatpush2.msra.mxu0 0.0
        %1211 = vmatprep.subr.mxu0 0.0
        %1212 = vmatpush2.msra.mxu0 0.0
        %1213 = vmatprep.subr.mxu0 0.0
        %1214 = vmatpush2.msra.mxu0 0.0
        %1215 = vmatprep.subr.mxu0 0.0
        %1216 = vmatpush2.msra.mxu0 0.0
        %1217 = vmatprep.subr.mxu0 0.0
        %1218 = vmatpush2.msra.mxu0 0.0
        %1219 = vmatprep.subr.mxu0 0.0
        %1220 = vmatpush2.msra.mxu0 0.0
        %1221 = vmatprep.subr.mxu0 0.0
        %1222 = vmatpush2.msra.mxu0 0.0
        %1223 = vmatprep.subr.mxu0 0.0
        %1224 = vmatpush2.msra.mxu0 0.0
        %1225 = vmatprep.subr.mxu0 0.0
        %1226 = vmatpush2.msra.mxu0 0.0
        %1227 = vmatprep.mubr.f32.mxu0 0.0
        %v1228 = vand.u32 %v1159, 4294901760
        %v1229 = vsub.f32 %v1159, %v1228
        %v1230 = vand.u32 %v1229, 4294901760
        %v1231 = vsub.f32 %v1229, %v1230
        %v1232 = vand.u32 %v1231, 4294901760
        %1233 = vmatmul.mubr.f32.gmra.mxu0 %v1232
        %v1234 = vpop.f32.mrf.mxu0
        %v1235 = vadd.f32 0.0, %v1234
        %v1236 = vpop.f32.mrf.mxu0
        %1237 = vdwg.mxu0
        %1238 = vmatprep.subr.mxu0 0.0
        %1239 = vmatpush1.msra.mxu0 0.0
        %1240 = vmatprep.subr.mxu0 0.0
        %1241 = vmatpush1.msra.mxu0 0.0
        %1242 = vmatprep.subr.mxu0 0.0
        %1243 = vmatpush1.msra.mxu0 0.0
        %1244 = vmatprep.subr.mxu0 0.0
        %1245 = vmatpush1.msra.mxu0 0.0
        %1246 = vmatprep.subr.mxu0 0.0
        %1247 = vmatpush1.msra.mxu0 0.0
        %1248 = vmatprep.subr.mxu0 0.0
        %1249 = vmatpush1.msra.mxu0 0.0
        %1250 = vmatprep.subr.mxu0 0.0
        %1251 = vmatpush1.msra.mxu0 0.0
        %1252 = vmatprep.subr.mxu0 0.0
        %1253 = vmatpush1.msra.mxu0 0.0
        %1254 = vmatprep.subr.mxu0 0.0
        %1255 = vmatpush1.msra.mxu0 0.0
        %1256 = vmatprep.subr.mxu0 0.0
        %1257 = vmatpush1.msra.mxu0 0.0
        %1258 = vmatprep.subr.mxu0 0.0
        %1259 = vmatpush1.msra.mxu0 0.0
        %1260 = vmatprep.subr.mxu0 0.0
        %1261 = vmatpush1.msra.mxu0 0.0
        %1262 = vmatprep.subr.mxu0 0.0
        %1263 = vmatpush1.msra.mxu0 0.0
        %1264 = vmatprep.subr.mxu0 0.0
        %1265 = vmatpush1.msra.mxu0 0.0
        %1266 = vmatprep.subr.mxu0 0.0
        %v1267 = vand.u32 %v1155, 4294901760
        %v1268 = vsub.f32 %v1155, %v1267
        %v1269 = vand.u32 %v1268, 4294901760
        %v1270 = vsub.f32 %v1268, %v1269
        %v1271 = vand.u32 %v1270, 4294901760
        %1272 = vmatpush1.msra.mxu0 %v1271
        %1273 = vmatprep.subr.mxu0 0.0
        %v1274 = vand.u32 %v1154, 4294901760
        %v1275 = vsub.f32 %v1154, %v1274
        %v1276 = vand.u32 %v1275, 4294901760
        %v1277 = vsub.f32 %v1275, %v1276
        %v1278 = vand.u32 %v1277, 4294901760
        %1279 = vmatpush1.msra.mxu0 %v1278
        %1280 = vmatprep.subr.mxu0 0.0
        %1281 = vmatpush2.msra.mxu0 0.0
        %1282 = vmatprep.subr.mxu0 0.0
        %1283 = vmatpush2.msra.mxu0 0.0
        %1284 = vmatprep.subr.mxu0 0.0
        %1285 = vmatpush2.msra.mxu0 0.0
        %1286 = vmatprep.subr.mxu0 0.0
        %1287 = vmatpush2.msra.mxu0 0.0
        %1288 = vmatprep.subr.mxu0 0.0
        %1289 = vmatpush2.msra.mxu0 0.0
        %1290 = vmatprep.subr.mxu0 0.0
        %1291 = vmatpush2.msra.mxu0 0.0
        %1292 = vmatprep.subr.mxu0 0.0
        %1293 = vmatpush2.msra.mxu0 0.0
        %1294 = vmatprep.subr.mxu0 0.0
        %1295 = vmatpush2.msra.mxu0 0.0
        %1296 = vmatprep.subr.mxu0 0.0
        %1297 = vmatpush2.msra.mxu0 0.0
        %1298 = vmatprep.subr.mxu0 0.0
        %1299 = vmatpush2.msra.mxu0 0.0
        %1300 = vmatprep.subr.mxu0 0.0
        %1301 = vmatpush2.msra.mxu0 0.0
        %1302 = vmatprep.subr.mxu0 0.0
        %1303 = vmatpush2.msra.mxu0 0.0
        %1304 = vmatprep.subr.mxu0 0.0
        %1305 = vmatpush2.msra.mxu0 0.0
        %1306 = vmatprep.subr.mxu0 0.0
        %1307 = vmatpush2.msra.mxu0 0.0
        %1308 = vmatprep.subr.mxu0 0.0
        %1309 = vmatpush2.msra.mxu0 0.0
        %1310 = vmatprep.subr.mxu0 0.0
        %1311 = vmatpush2.msra.mxu0 0.0
        %1312 = vmatprep.mubr.f32.mxu0 0.0
        %v1313 = vand.u32 %v1159, 4294901760
        %1314 = vmatmul.mubr.f32.gmra.mxu0 %v1313
        %v1315 = vpop.f32.mrf.mxu0
        %v1316 = vadd.f32 %v1235, %v1315
        %v1317 = vpop.f32.mrf.mxu0
        %1318 = vdwg.mxu0
        %1319 = vmatprep.subr.mxu0 0.0
        %1320 = vmatpush1.msra.mxu0 0.0
        %1321 = vmatprep.subr.mxu0 0.0
        %1322 = vmatpush1.msra.mxu0 0.0
        %1323 = vmatprep.subr.mxu0 0.0
        %1324 = vmatpush1.msra.mxu0 0.0
        %1325 = vmatprep.subr.mxu0 0.0
        %1326 = vmatpush1.msra.mxu0 0.0
        %1327 = vmatprep.subr.mxu0 0.0
        %1328 = vmatpush1.msra.mxu0 0.0
        %1329 = vmatprep.subr.mxu0 0.0
        %1330 = vmatpush1.msra.mxu0 0.0
        %1331 = vmatprep.subr.mxu0 0.0
        %1332 = vmatpush1.msra.mxu0 0.0
        %1333 = vmatprep.subr.mxu0 0.0
        %1334 = vmatpush1.msra.mxu0 0.0
        %1335 = vmatprep.subr.mxu0 0.0
        %1336 = vmatpush1.msra.mxu0 0.0
        %1337 = vmatprep.subr.mxu0 0.0
        %1338 = vmatpush1.msra.mxu0 0.0
        %1339 = vmatprep.subr.mxu0 0.0
        %1340 = vmatpush1.msra.mxu0 0.0
        %1341 = vmatprep.subr.mxu0 0.0
        %1342 = vmatpush1.msra.mxu0 0.0
        %1343 = vmatprep.subr.mxu0 0.0
        %1344 = vmatpush1.msra.mxu0 0.0
        %1345 = vmatprep.subr.mxu0 0.0
        %1346 = vmatpush1.msra.mxu0 0.0
        %1347 = vmatprep.subr.mxu0 0.0
        %v1348 = vand.u32 %v1155, 4294901760
        %v1349 = vsub.f32 %v1155, %v1348
        %1350 = vmatpush1.msra.mxu0 %v1349
        %1351 = vmatprep.subr.mxu0 0.0
        %v1352 = vand.u32 %v1154, 4294901760
        %v1353 = vsub.f32 %v1154, %v1352
        %1354 = vmatpush1.msra.mxu0 %v1353
        %1355 = vmatprep.subr.mxu0 0.0
        %1356 = vmatpush2.msra.mxu0 0.0
        %1357 = vmatprep.subr.mxu0 0.0
        %1358 = vmatpush2.msra.mxu0 0.0
        %1359 = vmatprep.subr.mxu0 0.0
        %1360 = vmatpush2.msra.mxu0 0.0
        %1361 = vmatprep.subr.mxu0 0.0
        %1362 = vmatpush2.msra.mxu0 0.0
        %1363 = vmatprep.subr.mxu0 0.0
        %1364 = vmatpush2.msra.mxu0 0.0
        %1365 = vmatprep.subr.mxu0 0.0
        %1366 = vmatpush2.msra.mxu0 0.0
        %1367 = vmatprep.subr.mxu0 0.0
        %1368 = vmatpush2.msra.mxu0 0.0
        %1369 = vmatprep.subr.mxu0 0.0
        %1370 = vmatpush2.msra.mxu0 0.0
        %1371 = vmatprep.subr.mxu0 0.0
        %1372 = vmatpush2.msra.mxu0 0.0
        %1373 = vmatprep.subr.mxu0 0.0
        %1374 = vmatpush2.msra.mxu0 0.0
        %1375 = vmatprep.subr.mxu0 0.0
        %1376 = vmatpush2.msra.mxu0 0.0
        %1377 = vmatprep.subr.mxu0 0.0
        %1378 = vmatpush2.msra.mxu0 0.0
        %1379 = vmatprep.subr.mxu0 0.0
        %1380 = vmatpush2.msra.mxu0 0.0
        %1381 = vmatprep.subr.mxu0 0.0
        %1382 = vmatpush2.msra.mxu0 0.0
        %1383 = vmatprep.subr.mxu0 0.0
        %1384 = vmatpush2.msra.mxu0 0.0
        %1385 = vmatprep.subr.mxu0 0.0
        %1386 = vmatpush2.msra.mxu0 0.0
        %1387 = vmatprep.mubr.f32.mxu0 0.0
        %v1388 = vand.u32 %v1159, 4294901760
        %v1389 = vsub.f32 %v1159, %v1388
        %1390 = vmatmul.mubr.f32.gmra.mxu0 %v1389
        %v1391 = vpop.f32.mrf.mxu0
        %v1392 = vadd.f32 %v1316, %v1391
        %v1393 = vpop.f32.mrf.mxu0
        %1394 = vdwg.mxu0
        %1395 = vmatprep.subr.mxu0 0.0
        %1396 = vmatpush1.msra.mxu0 0.0
        %1397 = vmatprep.subr.mxu0 0.0
        %1398 = vmatpush1.msra.mxu0 0.0
        %1399 = vmatprep.subr.mxu0 0.0
        %1400 = vmatpush1.msra.mxu0 0.0
        %1401 = vmatprep.subr.mxu0 0.0
        %1402 = vmatpush1.msra.mxu0 0.0
        %1403 = vmatprep.subr.mxu0 0.0
        %1404 = vmatpush1.msra.mxu0 0.0
        %1405 = vmatprep.subr.mxu0 0.0
        %1406 = vmatpush1.msra.mxu0 0.0
        %1407 = vmatprep.subr.mxu0 0.0
        %1408 = vmatpush1.msra.mxu0 0.0
        %1409 = vmatprep.subr.mxu0 0.0
        %1410 = vmatpush1.msra.mxu0 0.0
        %1411 = vmatprep.subr.mxu0 0.0
        %1412 = vmatpush1.msra.mxu0 0.0
        %1413 = vmatprep.subr.mxu0 0.0
        %1414 = vmatpush1.msra.mxu0 0.0
        %1415 = vmatprep.subr.mxu0 0.0
        %1416 = vmatpush1.msra.mxu0 0.0
        %1417 = vmatprep.subr.mxu0 0.0
        %1418 = vmatpush1.msra.mxu0 0.0
        %1419 = vmatprep.subr.mxu0 0.0
        %1420 = vmatpush1.msra.mxu0 0.0
        %1421 = vmatprep.subr.mxu0 0.0
        %1422 = vmatpush1.msra.mxu0 0.0
        %1423 = vmatprep.subr.mxu0 0.0
        %v1424 = vand.u32 %v1155, 4294901760
        %1425 = vmatpush1.msra.mxu0 %v1424
        %1426 = vmatprep.subr.mxu0 0.0
        %v1427 = vand.u32 %v1154, 4294901760
        %1428 = vmatpush1.msra.mxu0 %v1427
        %1429 = vmatprep.subr.mxu0 0.0
        %1430 = vmatpush2.msra.mxu0 0.0
        %1431 = vmatprep.subr.mxu0 0.0
        %1432 = vmatpush2.msra.mxu0 0.0
        %1433 = vmatprep.subr.mxu0 0.0
        %1434 = vmatpush2.msra.mxu0 0.0
        %1435 = vmatprep.subr.mxu0 0.0
        %1436 = vmatpush2.msra.mxu0 0.0
        %1437 = vmatprep.subr.mxu0 0.0
        %1438 = vmatpush2.msra.mxu0 0.0
        %1439 = vmatprep.subr.mxu0 0.0
        %1440 = vmatpush2.msra.mxu0 0.0
        %1441 = vmatprep.subr.mxu0 0.0
        %1442 = vmatpush2.msra.mxu0 0.0
        %1443 = vmatprep.subr.mxu0 0.0
        %1444 = vmatpush2.msra.mxu0 0.0
        %1445 = vmatprep.subr.mxu0 0.0
        %1446 = vmatpush2.msra.mxu0 0.0
        %1447 = vmatprep.subr.mxu0 0.0
        %1448 = vmatpush2.msra.mxu0 0.0
        %1449 = vmatprep.subr.mxu0 0.0
        %1450 = vmatpush2.msra.mxu0 0.0
        %1451 = vmatprep.subr.mxu0 0.0
        %1452 = vmatpush2.msra.mxu0 0.0
        %1453 = vmatprep.subr.mxu0 0.0
        %1454 = vmatpush2.msra.mxu0 0.0
        %1455 = vmatprep.subr.mxu0 0.0
        %1456 = vmatpush2.msra.mxu0 0.0
        %1457 = vmatprep.subr.mxu0 0.0
        %1458 = vmatpush2.msra.mxu0 0.0
        %1459 = vmatprep.subr.mxu0 0.0
        %1460 = vmatpush2.msra.mxu0 0.0
        %1461 = vmatprep.mubr.f32.mxu0 0.0
        %v1462 = vand.u32 %v1159, 4294901760
        %v1463 = vsub.f32 %v1159, %v1462
        %v1464 = vand.u32 %v1463, 4294901760
        %1465 = vmatmul.mubr.f32.gmra.mxu0 %v1464
        %v1466 = vpop.f32.mrf.mxu0
        %v1467 = vadd.f32 %v1392, %v1466
        %v1468 = vpop.f32.mrf.mxu0
        %1469 = vdwg.mxu0
        %1470 = vmatprep.subr.mxu0 0.0
        %1471 = vmatpush1.msra.mxu0 0.0
        %1472 = vmatprep.subr.mxu0 0.0
        %1473 = vmatpush1.msra.mxu0 0.0
        %1474 = vmatprep.subr.mxu0 0.0
        %1475 = vmatpush1.msra.mxu0 0.0
        %1476 = vmatprep.subr.mxu0 0.0
        %1477 = vmatpush1.msra.mxu0 0.0
        %1478 = vmatprep.subr.mxu0 0.0
        %1479 = vmatpush1.msra.mxu0 0.0
        %1480 = vmatprep.subr.mxu0 0.0
        %1481 = vmatpush1.msra.mxu0 0.0
        %1482 = vmatprep.subr.mxu0 0.0
        %1483 = vmatpush1.msra.mxu0 0.0
        %1484 = vmatprep.subr.mxu0 0.0
        %1485 = vmatpush1.msra.mxu0 0.0
        %1486 = vmatprep.subr.mxu0 0.0
        %1487 = vmatpush1.msra.mxu0 0.0
        %1488 = vmatprep.subr.mxu0 0.0
        %1489 = vmatpush1.msra.mxu0 0.0
        %1490 = vmatprep.subr.mxu0 0.0
        %1491 = vmatpush1.msra.mxu0 0.0
        %1492 = vmatprep.subr.mxu0 0.0
        %1493 = vmatpush1.msra.mxu0 0.0
        %1494 = vmatprep.subr.mxu0 0.0
        %1495 = vmatpush1.msra.mxu0 0.0
        %1496 = vmatprep.subr.mxu0 0.0
        %1497 = vmatpush1.msra.mxu0 0.0
        %1498 = vmatprep.subr.mxu0 0.0
        %v1499 = vand.u32 %v1155, 4294901760
        %v1500 = vsub.f32 %v1155, %v1499
        %v1501 = vand.u32 %v1500, 4294901760
        %1502 = vmatpush1.msra.mxu0 %v1501
        %1503 = vmatprep.subr.mxu0 0.0
        %v1504 = vand.u32 %v1154, 4294901760
        %v1505 = vsub.f32 %v1154, %v1504
        %v1506 = vand.u32 %v1505, 4294901760
        %1507 = vmatpush1.msra.mxu0 %v1506
        %1508 = vmatprep.subr.mxu0 0.0
        %1509 = vmatpush2.msra.mxu0 0.0
        %1510 = vmatprep.subr.mxu0 0.0
        %1511 = vmatpush2.msra.mxu0 0.0
        %1512 = vmatprep.subr.mxu0 0.0
        %1513 = vmatpush2.msra.mxu0 0.0
        %1514 = vmatprep.subr.mxu0 0.0
        %1515 = vmatpush2.msra.mxu0 0.0
        %1516 = vmatprep.subr.mxu0 0.0
        %1517 = vmatpush2.msra.mxu0 0.0
        %1518 = vmatprep.subr.mxu0 0.0
        %1519 = vmatpush2.msra.mxu0 0.0
        %1520 = vmatprep.subr.mxu0 0.0
        %1521 = vmatpush2.msra.mxu0 0.0
        %1522 = vmatprep.subr.mxu0 0.0
        %1523 = vmatpush2.msra.mxu0 0.0
        %1524 = vmatprep.subr.mxu0 0.0
        %1525 = vmatpush2.msra.mxu0 0.0
        %1526 = vmatprep.subr.mxu0 0.0
        %1527 = vmatpush2.msra.mxu0 0.0
        %1528 = vmatprep.subr.mxu0 0.0
        %1529 = vmatpush2.msra.mxu0 0.0
        %1530 = vmatprep.subr.mxu0 0.0
        %1531 = vmatpush2.msra.mxu0 0.0
        %1532 = vmatprep.subr.mxu0 0.0
        %1533 = vmatpush2.msra.mxu0 0.0
        %1534 = vmatprep.subr.mxu0 0.0
        %1535 = vmatpush2.msra.mxu0 0.0
        %1536 = vmatprep.subr.mxu0 0.0
        %1537 = vmatpush2.msra.mxu0 0.0
        %1538 = vmatprep.subr.mxu0 0.0
        %1539 = vmatpush2.msra.mxu0 0.0
        %1540 = vmatprep.mubr.f32.mxu0 0.0
        %v1541 = vand.u32 %v1159, 4294901760
        %1542 = vmatmul.mubr.f32.gmra.mxu0 %v1541
        %v1543 = vpop.f32.mrf.mxu0
        %v1544 = vadd.f32 %v1467, %v1543
        %v1545 = vpop.f32.mrf.mxu0
        %1546 = vdwg.mxu0
        %1547 = vmatprep.subr.mxu0 0.0
        %1548 = vmatpush1.msra.mxu0 0.0
        %1549 = vmatprep.subr.mxu0 0.0
        %1550 = vmatpush1.msra.mxu0 0.0
        %1551 = vmatprep.subr.mxu0 0.0
        %1552 = vmatpush1.msra.mxu0 0.0
        %1553 = vmatprep.subr.mxu0 0.0
        %1554 = vmatpush1.msra.mxu0 0.0
        %1555 = vmatprep.subr.mxu0 0.0
        %1556 = vmatpush1.msra.mxu0 0.0
        %1557 = vmatprep.subr.mxu0 0.0
        %1558 = vmatpush1.msra.mxu0 0.0
        %1559 = vmatprep.subr.mxu0 0.0
        %1560 = vmatpush1.msra.mxu0 0.0
        %1561 = vmatprep.subr.mxu0 0.0
        %1562 = vmatpush1.msra.mxu0 0.0
        %1563 = vmatprep.subr.mxu0 0.0
        %1564 = vmatpush1.msra.mxu0 0.0
        %1565 = vmatprep.subr.mxu0 0.0
        %1566 = vmatpush1.msra.mxu0 0.0
        %1567 = vmatprep.subr.mxu0 0.0
        %1568 = vmatpush1.msra.mxu0 0.0
        %1569 = vmatprep.subr.mxu0 0.0
        %1570 = vmatpush1.msra.mxu0 0.0
        %1571 = vmatprep.subr.mxu0 0.0
        %1572 = vmatpush1.msra.mxu0 0.0
        %1573 = vmatprep.subr.mxu0 0.0
        %1574 = vmatpush1.msra.mxu0 0.0
        %1575 = vmatprep.subr.mxu0 0.0
        %v1576 = vand.u32 %v1155, 4294901760
        %1577 = vmatpush1.msra.mxu0 %v1576
        %1578 = vmatprep.subr.mxu0 0.0
        %v1579 = vand.u32 %v1154, 4294901760
        %1580 = vmatpush1.msra.mxu0 %v1579
        %1581 = vmatprep.subr.mxu0 0.0
        %1582 = vmatpush2.msra.mxu0 0.0
        %1583 = vmatprep.subr.mxu0 0.0
        %1584 = vmatpush2.msra.mxu0 0.0
        %1585 = vmatprep.subr.mxu0 0.0
        %1586 = vmatpush2.msra.mxu0 0.0
        %1587 = vmatprep.subr.mxu0 0.0
        %1588 = vmatpush2.msra.mxu0 0.0
        %1589 = vmatprep.subr.mxu0 0.0
        %1590 = vmatpush2.msra.mxu0 0.0
        %1591 = vmatprep.subr.mxu0 0.0
        %1592 = vmatpush2.msra.mxu0 0.0
        %1593 = vmatprep.subr.mxu0 0.0
        %1594 = vmatpush2.msra.mxu0 0.0
        %1595 = vmatprep.subr.mxu0 0.0
        %1596 = vmatpush2.msra.mxu0 0.0
        %1597 = vmatprep.subr.mxu0 0.0
        %1598 = vmatpush2.msra.mxu0 0.0
        %1599 = vmatprep.subr.mxu0 0.0
        %1600 = vmatpush2.msra.mxu0 0.0
        %1601 = vmatprep.subr.mxu0 0.0
        %1602 = vmatpush2.msra.mxu0 0.0
        %1603 = vmatprep.subr.mxu0 0.0
        %1604 = vmatpush2.msra.mxu0 0.0
        %1605 = vmatprep.subr.mxu0 0.0
        %1606 = vmatpush2.msra.mxu0 0.0
        %1607 = vmatprep.subr.mxu0 0.0
        %1608 = vmatpush2.msra.mxu0 0.0
        %1609 = vmatprep.subr.mxu0 0.0
        %1610 = vmatpush2.msra.mxu0 0.0
        %1611 = vmatprep.subr.mxu0 0.0
        %1612 = vmatpush2.msra.mxu0 0.0
        %1613 = vmatprep.mubr.f32.mxu0 0.0
        %v1614 = vand.u32 %v1159, 4294901760
        %1615 = vmatmul.mubr.f32.gmra.mxu0 %v1614
        %v1616 = vpop.f32.mrf.mxu0
        %v1617 = vadd.f32 %v1544, %v1616
        %v1618 = vpop.f32.mrf.mxu0
        %1619 = vdwg.mxu0
        %s1620 = scalar_lea.vmem %s203, 8 [#allocation7]
        %1621 = vst.msk [vmem:[%s1620] sm:$0xf] %vm671, %v1617
        %1623 = vrot.lane.b32.xlu0 %v1617, 120
        %v1624 = vpop.permute.xlu0 %1623
        %s1626 = scalar_lea.vmem %s203, 12 [#allocation7]
        %1627 = vst.msk [vmem:[%s1626] sm:$0xf] %vm671, %v1624
        %v1628 = vld [vmem:[%s179] sm:$0xf]
        %v1629 = vld [vmem:[#allocation5] sm:$0xff]
        %v1630 = vld [vmem:[#allocation5 + $0x8] sm:$0xff]
        %1632 = vrot.lane.b32.xlu0 %v1628, 80
        %v1633 = vpop.permute.xlu0 %1632
        %v1634 = vsel %vm208, %v1633, 0
        %1636 = vmatprep.subr.mxu0 0.0
        %1637 = vmatpush1.msra.mxu0 0.0
        %1638 = vmatprep.subr.mxu0 0.0
        %1639 = vmatpush1.msra.mxu0 0.0
        %1640 = vmatprep.subr.mxu0 0.0
        %1641 = vmatpush1.msra.mxu0 0.0
        %1642 = vmatprep.subr.mxu0 0.0
        %1643 = vmatpush1.msra.mxu0 0.0
        %1644 = vmatprep.subr.mxu0 0.0
        %1645 = vmatpush1.msra.mxu0 0.0
        %1646 = vmatprep.subr.mxu0 0.0
        %1647 = vmatpush1.msra.mxu0 0.0
        %1648 = vmatprep.subr.mxu0 0.0
        %1649 = vmatpush1.msra.mxu0 0.0
        %1650 = vmatprep.subr.mxu0 0.0
        %1651 = vmatpush1.msra.mxu0 0.0
        %1652 = vmatprep.subr.mxu0 0.0
        %1653 = vmatpush1.msra.mxu0 0.0
        %1654 = vmatprep.subr.mxu0 0.0
        %1655 = vmatpush1.msra.mxu0 0.0
        %1656 = vmatprep.subr.mxu0 0.0
        %1657 = vmatpush1.msra.mxu0 0.0
        %1658 = vmatprep.subr.mxu0 0.0
        %1659 = vmatpush1.msra.mxu0 0.0
        %1660 = vmatprep.subr.mxu0 0.0
        %1661 = vmatpush1.msra.mxu0 0.0
        %1662 = vmatprep.subr.mxu0 0.0
        %1663 = vmatpush1.msra.mxu0 0.0
        %1664 = vmatprep.subr.mxu0 0.0
        %v1665 = vand.u32 %v1630, 4294901760
        %1666 = vmatpush1.msra.mxu0 %v1665
        %1667 = vmatprep.subr.mxu0 0.0
        %v1668 = vand.u32 %v1629, 4294901760
        %1669 = vmatpush1.msra.mxu0 %v1668
        %1670 = vmatprep.subr.mxu0 0.0
        %1671 = vmatpush2.msra.mxu0 0.0
        %1672 = vmatprep.subr.mxu0 0.0
        %1673 = vmatpush2.msra.mxu0 0.0
        %1674 = vmatprep.subr.mxu0 0.0
        %1675 = vmatpush2.msra.mxu0 0.0
        %1676 = vmatprep.subr.mxu0 0.0
        %1677 = vmatpush2.msra.mxu0 0.0
        %1678 = vmatprep.subr.mxu0 0.0
        %1679 = vmatpush2.msra.mxu0 0.0
        %1680 = vmatprep.subr.mxu0 0.0
        %1681 = vmatpush2.msra.mxu0 0.0
        %1682 = vmatprep.subr.mxu0 0.0
        %1683 = vmatpush2.msra.mxu0 0.0
        %1684 = vmatprep.subr.mxu0 0.0
        %1685 = vmatpush2.msra.mxu0 0.0
        %1686 = vmatprep.subr.mxu0 0.0
        %1687 = vmatpush2.msra.mxu0 0.0
        %1688 = vmatprep.subr.mxu0 0.0
        %1689 = vmatpush2.msra.mxu0 0.0
        %1690 = vmatprep.subr.mxu0 0.0
        %1691 = vmatpush2.msra.mxu0 0.0
        %1692 = vmatprep.subr.mxu0 0.0
        %1693 = vmatpush2.msra.mxu0 0.0
        %1694 = vmatprep.subr.mxu0 0.0
        %1695 = vmatpush2.msra.mxu0 0.0
        %1696 = vmatprep.subr.mxu0 0.0
        %1697 = vmatpush2.msra.mxu0 0.0
        %1698 = vmatprep.subr.mxu0 0.0
        %1699 = vmatpush2.msra.mxu0 0.0
        %1700 = vmatprep.subr.mxu0 0.0
        %1701 = vmatpush2.msra.mxu0 0.0
        %1702 = vmatprep.mubr.f32.mxu0 0.0
        %v1703 = vand.u32 %v1634, 4294901760
        %v1704 = vsub.f32 %v1634, %v1703
        %v1705 = vand.u32 %v1704, 4294901760
        %v1706 = vsub.f32 %v1704, %v1705
        %v1707 = vand.u32 %v1706, 4294901760
        %1708 = vmatmul.mubr.f32.gmra.mxu0 %v1707
        %v1709 = vpop.f32.mrf.mxu0
        %v1710 = vadd.f32 0.0, %v1709
        %v1711 = vpop.f32.mrf.mxu0
        %1712 = vdwg.mxu0
        %1713 = vmatprep.subr.mxu0 0.0
        %1714 = vmatpush1.msra.mxu0 0.0
        %1715 = vmatprep.subr.mxu0 0.0
        %1716 = vmatpush1.msra.mxu0 0.0
        %1717 = vmatprep.subr.mxu0 0.0
        %1718 = vmatpush1.msra.mxu0 0.0
        %1719 = vmatprep.subr.mxu0 0.0
        %1720 = vmatpush1.msra.mxu0 0.0
        %1721 = vmatprep.subr.mxu0 0.0
        %1722 = vmatpush1.msra.mxu0 0.0
        %1723 = vmatprep.subr.mxu0 0.0
        %1724 = vmatpush1.msra.mxu0 0.0
        %1725 = vmatprep.subr.mxu0 0.0
        %1726 = vmatpush1.msra.mxu0 0.0
        %1727 = vmatprep.subr.mxu0 0.0
        %1728 = vmatpush1.msra.mxu0 0.0
        %1729 = vmatprep.subr.mxu0 0.0
        %1730 = vmatpush1.msra.mxu0 0.0
        %1731 = vmatprep.subr.mxu0 0.0
        %1732 = vmatpush1.msra.mxu0 0.0
        %1733 = vmatprep.subr.mxu0 0.0
        %1734 = vmatpush1.msra.mxu0 0.0
        %1735 = vmatprep.subr.mxu0 0.0
        %1736 = vmatpush1.msra.mxu0 0.0
        %1737 = vmatprep.subr.mxu0 0.0
        %1738 = vmatpush1.msra.mxu0 0.0
        %1739 = vmatprep.subr.mxu0 0.0
        %1740 = vmatpush1.msra.mxu0 0.0
        %1741 = vmatprep.subr.mxu0 0.0
        %v1742 = vand.u32 %v1630, 4294901760
        %v1743 = vsub.f32 %v1630, %v1742
        %v1744 = vand.u32 %v1743, 4294901760
        %v1745 = vsub.f32 %v1743, %v1744
        %v1746 = vand.u32 %v1745, 4294901760
        %1747 = vmatpush1.msra.mxu0 %v1746
        %1748 = vmatprep.subr.mxu0 0.0
        %v1749 = vand.u32 %v1629, 4294901760
        %v1750 = vsub.f32 %v1629, %v1749
        %v1751 = vand.u32 %v1750, 4294901760
        %v1752 = vsub.f32 %v1750, %v1751
        %v1753 = vand.u32 %v1752, 4294901760
        %1754 = vmatpush1.msra.mxu0 %v1753
        %1755 = vmatprep.subr.mxu0 0.0
        %1756 = vmatpush2.msra.mxu0 0.0
        %1757 = vmatprep.subr.mxu0 0.0
        %1758 = vmatpush2.msra.mxu0 0.0
        %1759 = vmatprep.subr.mxu0 0.0
        %1760 = vmatpush2.msra.mxu0 0.0
        %1761 = vmatprep.subr.mxu0 0.0
        %1762 = vmatpush2.msra.mxu0 0.0
        %1763 = vmatprep.subr.mxu0 0.0
        %1764 = vmatpush2.msra.mxu0 0.0
        %1765 = vmatprep.subr.mxu0 0.0
        %1766 = vmatpush2.msra.mxu0 0.0
        %1767 = vmatprep.subr.mxu0 0.0
        %1768 = vmatpush2.msra.mxu0 0.0
        %1769 = vmatprep.subr.mxu0 0.0
        %1770 = vmatpush2.msra.mxu0 0.0
        %1771 = vmatprep.subr.mxu0 0.0
        %1772 = vmatpush2.msra.mxu0 0.0
        %1773 = vmatprep.subr.mxu0 0.0
        %1774 = vmatpush2.msra.mxu0 0.0
        %1775 = vmatprep.subr.mxu0 0.0
        %1776 = vmatpush2.msra.mxu0 0.0
        %1777 = vmatprep.subr.mxu0 0.0
        %1778 = vmatpush2.msra.mxu0 0.0
        %1779 = vmatprep.subr.mxu0 0.0
        %1780 = vmatpush2.msra.mxu0 0.0
        %1781 = vmatprep.subr.mxu0 0.0
        %1782 = vmatpush2.msra.mxu0 0.0
        %1783 = vmatprep.subr.mxu0 0.0
        %1784 = vmatpush2.msra.mxu0 0.0
        %1785 = vmatprep.subr.mxu0 0.0
        %1786 = vmatpush2.msra.mxu0 0.0
        %1787 = vmatprep.mubr.f32.mxu0 0.0
        %v1788 = vand.u32 %v1634, 4294901760
        %1789 = vmatmul.mubr.f32.gmra.mxu0 %v1788
        %v1790 = vpop.f32.mrf.mxu0
        %v1791 = vadd.f32 %v1710, %v1790
        %v1792 = vpop.f32.mrf.mxu0
        %1793 = vdwg.mxu0
        %1794 = vmatprep.subr.mxu0 0.0
        %1795 = vmatpush1.msra.mxu0 0.0
        %1796 = vmatprep.subr.mxu0 0.0
        %1797 = vmatpush1.msra.mxu0 0.0
        %1798 = vmatprep.subr.mxu0 0.0
        %1799 = vmatpush1.msra.mxu0 0.0
        %1800 = vmatprep.subr.mxu0 0.0
        %1801 = vmatpush1.msra.mxu0 0.0
        %1802 = vmatprep.subr.mxu0 0.0
        %1803 = vmatpush1.msra.mxu0 0.0
        %1804 = vmatprep.subr.mxu0 0.0
        %1805 = vmatpush1.msra.mxu0 0.0
        %1806 = vmatprep.subr.mxu0 0.0
        %1807 = vmatpush1.msra.mxu0 0.0
        %1808 = vmatprep.subr.mxu0 0.0
        %1809 = vmatpush1.msra.mxu0 0.0
        %1810 = vmatprep.subr.mxu0 0.0
        %1811 = vmatpush1.msra.mxu0 0.0
        %1812 = vmatprep.subr.mxu0 0.0
        %1813 = vmatpush1.msra.mxu0 0.0
        %1814 = vmatprep.subr.mxu0 0.0
        %1815 = vmatpush1.msra.mxu0 0.0
        %1816 = vmatprep.subr.mxu0 0.0
        %1817 = vmatpush1.msra.mxu0 0.0
        %1818 = vmatprep.subr.mxu0 0.0
        %1819 = vmatpush1.msra.mxu0 0.0
        %1820 = vmatprep.subr.mxu0 0.0
        %1821 = vmatpush1.msra.mxu0 0.0
        %1822 = vmatprep.subr.mxu0 0.0
        %v1823 = vand.u32 %v1630, 4294901760
        %v1824 = vsub.f32 %v1630, %v1823
        %1825 = vmatpush1.msra.mxu0 %v1824
        %1826 = vmatprep.subr.mxu0 0.0
        %v1827 = vand.u32 %v1629, 4294901760
        %v1828 = vsub.f32 %v1629, %v1827
        %1829 = vmatpush1.msra.mxu0 %v1828
        %1830 = vmatprep.subr.mxu0 0.0
        %1831 = vmatpush2.msra.mxu0 0.0
        %1832 = vmatprep.subr.mxu0 0.0
        %1833 = vmatpush2.msra.mxu0 0.0
        %1834 = vmatprep.subr.mxu0 0.0
        %1835 = vmatpush2.msra.mxu0 0.0
        %1836 = vmatprep.subr.mxu0 0.0
        %1837 = vmatpush2.msra.mxu0 0.0
        %1838 = vmatprep.subr.mxu0 0.0
        %1839 = vmatpush2.msra.mxu0 0.0
        %1840 = vmatprep.subr.mxu0 0.0
        %1841 = vmatpush2.msra.mxu0 0.0
        %1842 = vmatprep.subr.mxu0 0.0
        %1843 = vmatpush2.msra.mxu0 0.0
        %1844 = vmatprep.subr.mxu0 0.0
        %1845 = vmatpush2.msra.mxu0 0.0
        %1846 = vmatprep.subr.mxu0 0.0
        %1847 = vmatpush2.msra.mxu0 0.0
        %1848 = vmatprep.subr.mxu0 0.0
        %1849 = vmatpush2.msra.mxu0 0.0
        %1850 = vmatprep.subr.mxu0 0.0
        %1851 = vmatpush2.msra.mxu0 0.0
        %1852 = vmatprep.subr.mxu0 0.0
        %1853 = vmatpush2.msra.mxu0 0.0
        %1854 = vmatprep.subr.mxu0 0.0
        %1855 = vmatpush2.msra.mxu0 0.0
        %1856 = vmatprep.subr.mxu0 0.0
        %1857 = vmatpush2.msra.mxu0 0.0
        %1858 = vmatprep.subr.mxu0 0.0
        %1859 = vmatpush2.msra.mxu0 0.0
        %1860 = vmatprep.subr.mxu0 0.0
        %1861 = vmatpush2.msra.mxu0 0.0
        %1862 = vmatprep.mubr.f32.mxu0 0.0
        %v1863 = vand.u32 %v1634, 4294901760
        %v1864 = vsub.f32 %v1634, %v1863
        %1865 = vmatmul.mubr.f32.gmra.mxu0 %v1864
        %v1866 = vpop.f32.mrf.mxu0
        %v1867 = vadd.f32 %v1791, %v1866
        %v1868 = vpop.f32.mrf.mxu0
        %1869 = vdwg.mxu0
        %1870 = vmatprep.subr.mxu0 0.0
        %1871 = vmatpush1.msra.mxu0 0.0
        %1872 = vmatprep.subr.mxu0 0.0
        %1873 = vmatpush1.msra.mxu0 0.0
        %1874 = vmatprep.subr.mxu0 0.0
        %1875 = vmatpush1.msra.mxu0 0.0
        %1876 = vmatprep.subr.mxu0 0.0
        %1877 = vmatpush1.msra.mxu0 0.0
        %1878 = vmatprep.subr.mxu0 0.0
        %1879 = vmatpush1.msra.mxu0 0.0
        %1880 = vmatprep.subr.mxu0 0.0
        %1881 = vmatpush1.msra.mxu0 0.0
        %1882 = vmatprep.subr.mxu0 0.0
        %1883 = vmatpush1.msra.mxu0 0.0
        %1884 = vmatprep.subr.mxu0 0.0
        %1885 = vmatpush1.msra.mxu0 0.0
        %1886 = vmatprep.subr.mxu0 0.0
        %1887 = vmatpush1.msra.mxu0 0.0
        %1888 = vmatprep.subr.mxu0 0.0
        %1889 = vmatpush1.msra.mxu0 0.0
        %1890 = vmatprep.subr.mxu0 0.0
        %1891 = vmatpush1.msra.mxu0 0.0
        %1892 = vmatprep.subr.mxu0 0.0
        %1893 = vmatpush1.msra.mxu0 0.0
        %1894 = vmatprep.subr.mxu0 0.0
        %1895 = vmatpush1.msra.mxu0 0.0
        %1896 = vmatprep.subr.mxu0 0.0
        %1897 = vmatpush1.msra.mxu0 0.0
        %1898 = vmatprep.subr.mxu0 0.0
        %v1899 = vand.u32 %v1630, 4294901760
        %1900 = vmatpush1.msra.mxu0 %v1899
        %1901 = vmatprep.subr.mxu0 0.0
        %v1902 = vand.u32 %v1629, 4294901760
        %1903 = vmatpush1.msra.mxu0 %v1902
        %1904 = vmatprep.subr.mxu0 0.0
        %1905 = vmatpush2.msra.mxu0 0.0
        %1906 = vmatprep.subr.mxu0 0.0
        %1907 = vmatpush2.msra.mxu0 0.0
        %1908 = vmatprep.subr.mxu0 0.0
        %1909 = vmatpush2.msra.mxu0 0.0
        %1910 = vmatprep.subr.mxu0 0.0
        %1911 = vmatpush2.msra.mxu0 0.0
        %1912 = vmatprep.subr.mxu0 0.0
        %1913 = vmatpush2.msra.mxu0 0.0
        %1914 = vmatprep.subr.mxu0 0.0
        %1915 = vmatpush2.msra.mxu0 0.0
        %1916 = vmatprep.subr.mxu0 0.0
        %1917 = vmatpush2.msra.mxu0 0.0
        %1918 = vmatprep.subr.mxu0 0.0
        %1919 = vmatpush2.msra.mxu0 0.0
        %1920 = vmatprep.subr.mxu0 0.0
        %1921 = vmatpush2.msra.mxu0 0.0
        %1922 = vmatprep.subr.mxu0 0.0
        %1923 = vmatpush2.msra.mxu0 0.0
        %1924 = vmatprep.subr.mxu0 0.0
        %1925 = vmatpush2.msra.mxu0 0.0
        %1926 = vmatprep.subr.mxu0 0.0
        %1927 = vmatpush2.msra.mxu0 0.0
        %1928 = vmatprep.subr.mxu0 0.0
        %1929 = vmatpush2.msra.mxu0 0.0
        %1930 = vmatprep.subr.mxu0 0.0
        %1931 = vmatpush2.msra.mxu0 0.0
        %1932 = vmatprep.subr.mxu0 0.0
        %1933 = vmatpush2.msra.mxu0 0.0
        %1934 = vmatprep.subr.mxu0 0.0
        %1935 = vmatpush2.msra.mxu0 0.0
        %1936 = vmatprep.mubr.f32.mxu0 0.0
        %v1937 = vand.u32 %v1634, 4294901760
        %v1938 = vsub.f32 %v1634, %v1937
        %v1939 = vand.u32 %v1938, 4294901760
        %1940 = vmatmul.mubr.f32.gmra.mxu0 %v1939
        %v1941 = vpop.f32.mrf.mxu0
        %v1942 = vadd.f32 %v1867, %v1941
        %v1943 = vpop.f32.mrf.mxu0
        %1944 = vdwg.mxu0
        %1945 = vmatprep.subr.mxu0 0.0
        %1946 = vmatpush1.msra.mxu0 0.0
        %1947 = vmatprep.subr.mxu0 0.0
        %1948 = vmatpush1.msra.mxu0 0.0
        %1949 = vmatprep.subr.mxu0 0.0
        %1950 = vmatpush1.msra.mxu0 0.0
        %1951 = vmatprep.subr.mxu0 0.0
        %1952 = vmatpush1.msra.mxu0 0.0
        %1953 = vmatprep.subr.mxu0 0.0
        %1954 = vmatpush1.msra.mxu0 0.0
        %1955 = vmatprep.subr.mxu0 0.0
        %1956 = vmatpush1.msra.mxu0 0.0
        %1957 = vmatprep.subr.mxu0 0.0
        %1958 = vmatpush1.msra.mxu0 0.0
        %1959 = vmatprep.subr.mxu0 0.0
        %1960 = vmatpush1.msra.mxu0 0.0
        %1961 = vmatprep.subr.mxu0 0.0
        %1962 = vmatpush1.msra.mxu0 0.0
        %1963 = vmatprep.subr.mxu0 0.0
        %1964 = vmatpush1.msra.mxu0 0.0
        %1965 = vmatprep.subr.mxu0 0.0
        %1966 = vmatpush1.msra.mxu0 0.0
        %1967 = vmatprep.subr.mxu0 0.0
        %1968 = vmatpush1.msra.mxu0 0.0
        %1969 = vmatprep.subr.mxu0 0.0
        %1970 = vmatpush1.msra.mxu0 0.0
        %1971 = vmatprep.subr.mxu0 0.0
        %1972 = vmatpush1.msra.mxu0 0.0
        %1973 = vmatprep.subr.mxu0 0.0
        %v1974 = vand.u32 %v1630, 4294901760
        %v1975 = vsub.f32 %v1630, %v1974
        %v1976 = vand.u32 %v1975, 4294901760
        %1977 = vmatpush1.msra.mxu0 %v1976
        %1978 = vmatprep.subr.mxu0 0.0
        %v1979 = vand.u32 %v1629, 4294901760
        %v1980 = vsub.f32 %v1629, %v1979
        %v1981 = vand.u32 %v1980, 4294901760
        %1982 = vmatpush1.msra.mxu0 %v1981
        %1983 = vmatprep.subr.mxu0 0.0
        %1984 = vmatpush2.msra.mxu0 0.0
        %1985 = vmatprep.subr.mxu0 0.0
        %1986 = vmatpush2.msra.mxu0 0.0
        %1987 = vmatprep.subr.mxu0 0.0
        %1988 = vmatpush2.msra.mxu0 0.0
        %1989 = vmatprep.subr.mxu0 0.0
        %1990 = vmatpush2.msra.mxu0 0.0
        %1991 = vmatprep.subr.mxu0 0.0
        %1992 = vmatpush2.msra.mxu0 0.0
        %1993 = vmatprep.subr.mxu0 0.0
        %1994 = vmatpush2.msra.mxu0 0.0
        %1995 = vmatprep.subr.mxu0 0.0
        %1996 = vmatpush2.msra.mxu0 0.0
        %1997 = vmatprep.subr.mxu0 0.0
        %1998 = vmatpush2.msra.mxu0 0.0
        %1999 = vmatprep.subr.mxu0 0.0
        %2000 = vmatpush2.msra.mxu0 0.0
        %2001 = vmatprep.subr.mxu0 0.0
        %2002 = vmatpush2.msra.mxu0 0.0
        %2003 = vmatprep.subr.mxu0 0.0
        %2004 = vmatpush2.msra.mxu0 0.0
        %2005 = vmatprep.subr.mxu0 0.0
        %2006 = vmatpush2.msra.mxu0 0.0
        %2007 = vmatprep.subr.mxu0 0.0
        %2008 = vmatpush2.msra.mxu0 0.0
        %2009 = vmatprep.subr.mxu0 0.0
        %2010 = vmatpush2.msra.mxu0 0.0
        %2011 = vmatprep.subr.mxu0 0.0
        %2012 = vmatpush2.msra.mxu0 0.0
        %2013 = vmatprep.subr.mxu0 0.0
        %2014 = vmatpush2.msra.mxu0 0.0
        %2015 = vmatprep.mubr.f32.mxu0 0.0
        %v2016 = vand.u32 %v1634, 4294901760
        %2017 = vmatmul.mubr.f32.gmra.mxu0 %v2016
        %v2018 = vpop.f32.mrf.mxu0
        %v2019 = vadd.f32 %v1942, %v2018
        %v2020 = vpop.f32.mrf.mxu0
        %2021 = vdwg.mxu0
        %2022 = vmatprep.subr.mxu0 0.0
        %2023 = vmatpush1.msra.mxu0 0.0
        %2024 = vmatprep.subr.mxu0 0.0
        %2025 = vmatpush1.msra.mxu0 0.0
        %2026 = vmatprep.subr.mxu0 0.0
        %2027 = vmatpush1.msra.mxu0 0.0
        %2028 = vmatprep.subr.mxu0 0.0
        %2029 = vmatpush1.msra.mxu0 0.0
        %2030 = vmatprep.subr.mxu0 0.0
        %2031 = vmatpush1.msra.mxu0 0.0
        %2032 = vmatprep.subr.mxu0 0.0
        %2033 = vmatpush1.msra.mxu0 0.0
        %2034 = vmatprep.subr.mxu0 0.0
        %2035 = vmatpush1.msra.mxu0 0.0
        %2036 = vmatprep.subr.mxu0 0.0
        %2037 = vmatpush1.msra.mxu0 0.0
        %2038 = vmatprep.subr.mxu0 0.0
        %2039 = vmatpush1.msra.mxu0 0.0
        %2040 = vmatprep.subr.mxu0 0.0
        %2041 = vmatpush1.msra.mxu0 0.0
        %2042 = vmatprep.subr.mxu0 0.0
        %2043 = vmatpush1.msra.mxu0 0.0
        %2044 = vmatprep.subr.mxu0 0.0
        %2045 = vmatpush1.msra.mxu0 0.0
        %2046 = vmatprep.subr.mxu0 0.0
        %2047 = vmatpush1.msra.mxu0 0.0
        %2048 = vmatprep.subr.mxu0 0.0
        %2049 = vmatpush1.msra.mxu0 0.0
        %2050 = vmatprep.subr.mxu0 0.0
        %v2051 = vand.u32 %v1630, 4294901760
        %2052 = vmatpush1.msra.mxu0 %v2051
        %2053 = vmatprep.subr.mxu0 0.0
        %v2054 = vand.u32 %v1629, 4294901760
        %2055 = vmatpush1.msra.mxu0 %v2054
        %2056 = vmatprep.subr.mxu0 0.0
        %2057 = vmatpush2.msra.mxu0 0.0
        %2058 = vmatprep.subr.mxu0 0.0
        %2059 = vmatpush2.msra.mxu0 0.0
        %2060 = vmatprep.subr.mxu0 0.0
        %2061 = vmatpush2.msra.mxu0 0.0
        %2062 = vmatprep.subr.mxu0 0.0
        %2063 = vmatpush2.msra.mxu0 0.0
        %2064 = vmatprep.subr.mxu0 0.0
        %2065 = vmatpush2.msra.mxu0 0.0
        %2066 = vmatprep.subr.mxu0 0.0
        %2067 = vmatpush2.msra.mxu0 0.0
        %2068 = vmatprep.subr.mxu0 0.0
        %2069 = vmatpush2.msra.mxu0 0.0
        %2070 = vmatprep.subr.mxu0 0.0
        %2071 = vmatpush2.msra.mxu0 0.0
        %2072 = vmatprep.subr.mxu0 0.0
        %2073 = vmatpush2.msra.mxu0 0.0
        %2074 = vmatprep.subr.mxu0 0.0
        %2075 = vmatpush2.msra.mxu0 0.0
        %2076 = vmatprep.subr.mxu0 0.0
        %2077 = vmatpush2.msra.mxu0 0.0
        %2078 = vmatprep.subr.mxu0 0.0
        %2079 = vmatpush2.msra.mxu0 0.0
        %2080 = vmatprep.subr.mxu0 0.0
        %2081 = vmatpush2.msra.mxu0 0.0
        %2082 = vmatprep.subr.mxu0 0.0
        %2083 = vmatpush2.msra.mxu0 0.0
        %2084 = vmatprep.subr.mxu0 0.0
        %2085 = vmatpush2.msra.mxu0 0.0
        %2086 = vmatprep.subr.mxu0 0.0
        %2087 = vmatpush2.msra.mxu0 0.0
        %2088 = vmatprep.mubr.f32.mxu0 0.0
        %v2089 = vand.u32 %v1634, 4294901760
        %2090 = vmatmul.mubr.f32.gmra.mxu0 %v2089
        %v2091 = vpop.f32.mrf.mxu0
        %v2092 = vadd.f32 %v2019, %v2091
        %v2093 = vpop.f32.mrf.mxu0
        %2094 = vdwg.mxu0
        %2096 = vrot.lane.b32.xlu0 %v2092, 8
        %v2097 = vpop.permute.xlu0 %2096
        %2099 = vst.msk [vmem:[%s1620] sm:$0xf] %vm1150, %v2097
        %2100 = vst.msk [vmem:[%s1626] sm:$0xf] %vm1150, %v2092
        %s2101 = sand.u32 %s102, 1
        %s2102 = scalar_lea.sflag [#allocation4], %s2101
        %s2103 = sand.u32 %s102, 1
        %s2104 = smul.addr %s2103, 16
        %s2105 = scalar_lea.vmem [#allocation7], %s2104
        // Predicated region
        $region37: #{tpu_custom_call.1} parent=27 // pred_check
          %p2106 = pneg %p112
        $region38: #{tpu_custom_call.1} parent=27 // pred_check_branch
          %2108 = sbr.rel (%p2106) target = $region40
        $region39: #{tpu_custom_call.1} parent=27 // pred_region
          %s2109 = smul.u32 4, %s26
          %s2111 = ssub.s32 256, 256
          %2112 = vsyncadd %s2102, %s2111
          %s2113 = sadd.s32 %s27, %s2109
          %s2114 = smul.addr %s25, 16
          %s2115 = sadd.s32 %s2113, %s2114
          %s2116 = smul.addr %s2115, 64
          %s2117 = scalar_lea.hbm %s2, %s2116
          %s2118 = sshll.u32 %s2105, 4
          %s2119 = int_to_ptr.vmem [resolvable:$true] %s2118
          %2124 = dma.vmem_to_hbm [thread:$0]  %s2119, 256, %s2117, %s2102, 64, 64, 4
        $region40: #{tpu_custom_call.1} parent=27 // pred_fallthru
          _
      $region28: #{tpu_custom_call.1} parent=5 // pred_fallthru
        _
      %p2125 = scmp.le.s32.totalorder 2, %s15
      // Predicated region
      $region41: #{tpu_custom_call.1} parent=5 // pred_check
        %p2126 = pneg %p2125
      $region42: #{tpu_custom_call.1} parent=5 // pred_check_branch
        %2128 = sbr.rel (%p2126) target = $region44
      $region43: #{tpu_custom_call.1} parent=5 // pred_region
        %s2129 = ssub.s32 %s15, 2
        // Predicated region
        $region45: #{tpu_custom_call.1} parent=43 // pred_check
          %p2130 = pneg %p118
        $region46: #{tpu_custom_call.1} parent=43 // pred_check_branch
          %2132 = sbr.rel (%p2130) target = $region48
        $region47: #{tpu_custom_call.1} parent=43 // pred_region
          %s2133 = sand.u32 %s103, 1
          %s2134 = scalar_lea.sflag [#allocation4], %s2133
          %s2135 = sand.u32 %s103, 1
          %s2136 = smul.addr %s2135, 16
          %s2137 = scalar_lea.vmem [#allocation7], %s2136
          %2138 = dma.done %s2134, 256
        $region48: #{tpu_custom_call.1} parent=43 // pred_fallthru
          _
      $region44: #{tpu_custom_call.1} parent=5 // pred_fallthru
        _
    $region6: #{tpu_custom_call.1} parent=1 // loop_footer
      %s19 = sadd.s32 1, %s15
    $region7: #{tpu_custom_call.1} parent=1 // loop_footer_branch
      %14 = sbr.rel target = $region3
    $region8: #{tpu_custom_call.1} parent=1 // loop_exit
      _
    %2139 = vsyncpa [#allocation3], 1
    %s2140 = scalar_lea.sflag [#allocation3], 1
    %2141 = vsyncpa %s2140, 1
    %2142 = vsyncpa [#allocation6], 1
    %2143 = vsyncpa [#allocation4], 1
    %s2144 = scalar_lea.sflag [#allocation4], 1
    %2145 = vsyncpa %s2144, 1

</llo_original>
